<compile_context>
chip_gen: v7x
topology: tpu7x:2x2x1
jax: 0.10.0
libtpu: 0.0.40
codegen_flags: <defaults>
</compile_context>

<pallas_src>
import jax
import jax.numpy as jnp
from jax.experimental import pallas as pl
from jax.experimental.pallas import tpu as pltpu


def _fused_ccn_kernel(x_ref,
                      w1_ref, b1_ref, w2_ref, b2_ref,
                      w3_ref, b3_ref, w4_ref, b4_ref,
                      o1_ref, o2_ref, o3_ref, o4_ref,
                      pad_a_ref, pad_b_ref):
    # x_ref   : (N, H, W*C0)          lane-dense input
    # wX_ref  : (KH*W*Cin, W*Cout)    stacked banded weights (width taps, width
    #                                 padding and the KH height taps folded in)
    # bX_ref  : (1, W*Cout)           bias tiled over width
    # o1..o3  : (N*H, W*Cout)         lane-dense outputs
    # o4_ref  : (N*H/fold, fold*W*C4) narrow last output packed to 128 lanes
    # pad_*   : (N, H+2*pad, W*C)     VMEM scratch with zero halo rows
    N, H, wc0 = x_ref.shape
    PAD = (pad_a_ref.shape[1] - H) // 2          # halo rows per side
    KH = 2 * PAD + 1

    def conv_sigmoid(pad_ref, w_ref, b_ref):
        wci = pad_ref.shape[-1]
        # im2col over the KH height taps only -> ONE long-K lane-dense matmul.
        patch = jnp.concatenate(
            [pad_ref[:, kh:kh + H, :].reshape(N * H, wci) for kh in range(KH)],
            axis=-1)                                       # (N*H, KH*W*Cin)
        acc = jnp.dot(patch, w_ref[...], preferred_element_type=jnp.float32)
        return jax.nn.sigmoid(acc + b_ref[...])            # (N*H, W*Cout)

    # Stage the input into the zero-halo scratch: only the halo rows are
    # zeroed, the interior is overwritten right after (no full memset).
    zeros_a = jnp.zeros((N, PAD, wc0), jnp.float32)
    pad_a_ref[:, :PAD, :] = zeros_a
    pad_a_ref[:, H + PAD:, :] = zeros_a
    pad_a_ref[:, PAD:PAD + H, :] = x_ref[...]

    a1 = conv_sigmoid(pad_a_ref, w1_ref, b1_ref)
    o1_ref[...] = a1.astype(o1_ref.dtype)

    wc1 = pad_b_ref.shape[-1]
    zeros_b = jnp.zeros((N, PAD, wc1), jnp.float32)
    pad_b_ref[:, :PAD, :] = zeros_b              # halo zeroed once, the same
    pad_b_ref[:, H + PAD:, :] = zeros_b          # scratch is reused by layers 2..4

    pad_b_ref[:, PAD:PAD + H, :] = a1.reshape(N, H, wc1)
    a2 = conv_sigmoid(pad_b_ref, w2_ref, b2_ref)
    o2_ref[...] = a2.astype(o2_ref.dtype)

    pad_b_ref[:, PAD:PAD + H, :] = a2.reshape(N, H, wc1)
    a3 = conv_sigmoid(pad_b_ref, w3_ref, b3_ref)
    o3_ref[...] = a3.astype(o3_ref.dtype)

    pad_b_ref[:, PAD:PAD + H, :] = a3.reshape(N, H, wc1)
    a4 = conv_sigmoid(pad_b_ref, w4_ref, b4_ref)
    # Narrow (64-lane) last output: pack row-blocks side by side so the final
    # store is a full, unmasked 128-lane slab (undone in the wrapper).
    fold = o4_ref.shape[-1] // a4.shape[-1]
    if fold > 1:
        rows = o4_ref.shape[0]
        a4 = jnp.concatenate(
            [a4[i * rows:(i + 1) * rows, :] for i in range(fold)], axis=-1)
    o4_ref[...] = a4.astype(o4_ref.dtype)


def _band_weight(w_oihw, width, padding):
    """Fold a conv's width (KW) taps + width zero-padding + the KH height taps
    into ONE stacked banded matrix of shape (KH*W*Cin, W*Cout); the conv then
    becomes a single lane-dense MXU matmul per layer."""
    cout, cin, kh_sz, kw_sz = w_oihw.shape
    w_hwio = jnp.transpose(w_oihw, (2, 3, 1, 0)).astype(jnp.float32)
    bands = []
    for kh in range(kh_sz):
        band = jnp.zeros((width * cin, width * cout), jnp.float32)
        for kw in range(kw_sz):
            # selector[w_in, w_out] = 1  iff  w_in == w_out + kw - padding
            sel = jnp.eye(width, k=padding - kw, dtype=jnp.float32)
            band = band + jnp.kron(sel, w_hwio[kh, kw])
        bands.append(band)
    return jnp.concatenate(bands, axis=0)        # (KH*W*Cin, W*Cout)


def prepare_ccn_params(params, width):
    """One-time preprocessing (model init / after a weight update): fold the
    conv weights into stacked banded matrices and tile the biases, so nothing
    is rebuilt per forward call (review item: per-call kron/eye removal)."""
    layers = [params["conv"][0]] + list(params["coupling"])
    cin_expected = None
    wbands, biases = [], []
    for i, lyr in enumerate(layers):
        cout, cin, kh_sz, kw_sz = (int(d) for d in lyr["w"].shape)
        stride, pad = int(lyr["stride"]), int(lyr["padding"])
        assert stride == 1, "this kernel instantiation supports stride=1 only"
        assert kh_sz == kw_sz == 2 * pad + 1, (
            "kernel assumes a 'same' conv: kernel_size == 2*padding + 1")
        if cin_expected is not None:
            assert cin == cin_expected, "layer channel chaining mismatch"
        if i >= 2:
            assert cin == int(layers[1]["w"].shape[1]), (
                "coupling layers must share one input channel count "
                "(single shared halo scratch)")
        cin_expected = cout
        wbands.append(_band_weight(lyr["w"], width, pad))
        biases.append(jnp.tile(lyr["b"].astype(jnp.float32), width)
                      .reshape(1, width * cout))
    return {"wbands": tuple(wbands), "biases": tuple(biases)}


def ccn_forward(prepared, x_nchw):
    """CCN.forward: a1 = conv[0](x); a2..a4 = coupling[0..2] chained.
    Single fused pallas_call; returns NCHW tensors like the PyTorch module."""
    wbands, biases = prepared["wbands"], prepared["biases"]

    # NCHW only at the public API boundary (PyTorch layout).
    x = jnp.transpose(x_nchw, (0, 2, 3, 1)).astype(jnp.float32)   # NCHW -> NHWC
    N, H, W, C0 = x.shape
    x2d = x.reshape(N, H, W * C0)                                 # lane = W*Cin

    couts = [wb.shape[1] // W for wb in wbands]
    cins = [C0] + couts[:-1]
    KH = wbands[0].shape[0] // (W * cins[0])
    assert wbands[0].shape[0] == KH * W * cins[0], "band/input channel mismatch"

    # Pack the narrow last output into a 128-lane-dense slab when possible:
    # (N*H, W*C4) -> (N*H/fold, fold*W*C4); undone below with a concat.
    wc_last = W * couts[-1]
    fold = 1
    if wc_last < 128 and 128 % wc_last == 0 and (N * H) % (128 // wc_last) == 0:
        fold = 128 // wc_last

    out_shapes = tuple(
        jax.ShapeDtypeStruct((N * H, W * co), jnp.float32) for co in couts[:-1]
    ) + (jax.ShapeDtypeStruct((N * H // fold, fold * wc_last), jnp.float32),)

    def full_spec(shape):
        return pl.BlockSpec(shape, lambda i: (0,) * len(shape))

    in_specs = [full_spec(x2d.shape)]
    flat_args = [x2d]
    for wb, b in zip(wbands, biases):
        in_specs += [full_spec(wb.shape), full_spec(b.shape)]
        flat_args += [wb, b]
    out_specs = tuple(full_spec(s.shape) for s in out_shapes)

    # Scheduler hints.  NOTE: flops are the banded (W/KW-inflated) flops — a
    # hint only, not achieved useful flops.
    flops = 2 * sum(N * H * (KH * W * ci) * (W * co)
                    for ci, co in zip(cins, couts))
    transcendentals = sum(N * H * W * co for co in couts)
    io_bytes = 4 * (x2d.size
                    + sum(wb.size for wb in wbands)
                    + sum(b.size for b in biases)
                    + sum(N * H * W * co for co in couts))

    outs = pl.pallas_call(
        _fused_ccn_kernel,
        out_shape=out_shapes,
        grid=(1,),
        in_specs=in_specs,
        out_specs=out_specs,
        scratch_shapes=[
            pltpu.VMEM((N, H + KH - 1, W * cins[0]), jnp.float32),
            pltpu.VMEM((N, H + KH - 1, W * cins[1]), jnp.float32),
        ],
        compiler_params=pltpu.CompilerParams(
            dimension_semantics=("arbitrary",),
            # Explicit VMEM budget: 2x (double-buffered) I/O + headroom.
            vmem_limit_bytes=int(2 * io_bytes) + (16 << 20)),
        cost_estimate=pl.CostEstimate(flops=flops,
                                      transcendentals=transcendentals,
                                      bytes_accessed=io_bytes),
    )(*flat_args)

    # Undo the lane packing of the last output, then back to PyTorch NCHW.
    o_last = outs[-1]
    if fold > 1:
        o_last = jnp.concatenate(
            [o_last[:, i * wc_last:(i + 1) * wc_last] for i in range(fold)],
            axis=0)
    outs = list(outs[:-1]) + [o_last]
    return tuple(
        jnp.transpose(o.reshape(N, H, W, co), (0, 3, 1, 2))
        for o, co in zip(outs, couts))


def init_conv_params(key, layer_config):
    """Deterministic init for one (kernel, Cin, Cout, stride, pad) block."""
    k, cin, cout, stride, pad = layer_config
    kw_key, kb_key = jax.random.split(key)
    fan_in = cin * k * k
    bound = 1.0 / jnp.sqrt(fan_in)
    w = jax.random.uniform(kw_key, (cout, cin, k, k), jnp.float32, -bound, bound)
    b = jax.random.uniform(kb_key, (cout,), jnp.float32, -bound, bound)
    return {"w": w, "b": b, "stride": stride, "padding": pad}


def _ref_conv_sigmoid(x, w, b, stride, padding):
    y = jax.lax.conv_general_dilated(
        x, w, window_strides=(stride, stride),
        padding=[(padding, padding), (padding, padding)],
        dimension_numbers=("NCHW", "OIHW", "NCHW"))
    return jax.nn.sigmoid(y + b[None, :, None, None])


if __name__ == "__main__":
    # architecture_config: (kernel_size, in_ch, out_ch, stride, padding)
    in_channels = 4
    conv_config = [(3, 4, 8, 1, 1)]
    coupling_config = [(3, 8, 8, 1, 1), (3, 8, 8, 1, 1), (3, 8, 4, 1, 1)]

    root = jax.random.PRNGKey(0)
    keys = jax.random.split(root, 1 + len(conv_config) + len(coupling_config))
    x = jax.random.normal(keys[0], (2, 4, 16, 16), jnp.float32)  # NCHW like PyTorch

    params = {
        "conv": [init_conv_params(keys[1 + i], c) for i, c in enumerate(conv_config)],
        "coupling": [init_conv_params(keys[1 + len(conv_config) + i], c)
                     for i, c in enumerate(coupling_config)],
    }

    # Init-time caching of the banded weights / tiled biases (review item #1).
    prepared = prepare_ccn_params(params, width=x.shape[3])
    fwd = jax.jit(ccn_forward)

    a1, a2, a3, a4 = jax.block_until_ready(fwd(prepared, x))

    # reference check against XLA conv + sigmoid
    r1 = _ref_conv_sigmoid(x, params["conv"][0]["w"], params["conv"][0]["b"], 1, 1)
    r2 = _ref_conv_sigmoid(r1, params["coupling"][0]["w"], params["coupling"][0]["b"], 1, 1)
    r3 = _ref_conv_sigmoid(r2, params["coupling"][1]["w"], params["coupling"][1]["b"], 1, 1)
    r4 = _ref_conv_sigmoid(r3, params["coupling"][2]["w"], params["coupling"][2]["b"], 1, 1)
    for got, ref in zip((a1, a2, a3, a4), (r1, r2, r3, r4)):
        assert got.shape == ref.shape and got.dtype == ref.dtype
        assert jnp.max(jnp.abs(got - ref)) < 3e-5

    print("KERNEL_OK")
</pallas_src>

<mosaic_0001>
module attributes {stable_mosaic.version = 11 : i64} {
  func.func @_fused_ccn_kernel(%arg0: i32, %arg1: memref<2x16x64xf32, #tpu.memory_space<vmem>>, %arg2: memref<192x128xf32, #tpu.memory_space<vmem>>, %arg3: memref<1x128xf32, #tpu.memory_space<vmem>>, %arg4: memref<384x128xf32, #tpu.memory_space<vmem>>, %arg5: memref<1x128xf32, #tpu.memory_space<vmem>>, %arg6: memref<384x128xf32, #tpu.memory_space<vmem>>, %arg7: memref<1x128xf32, #tpu.memory_space<vmem>>, %arg8: memref<384x64xf32, #tpu.memory_space<vmem>>, %arg9: memref<1x64xf32, #tpu.memory_space<vmem>>, %arg10: memref<32x128xf32, #tpu.memory_space<vmem>>, %arg11: memref<32x128xf32, #tpu.memory_space<vmem>>, %arg12: memref<32x128xf32, #tpu.memory_space<vmem>>, %arg13: memref<16x128xf32, #tpu.memory_space<vmem>>, %arg14: memref<2x18x64xf32, #tpu.memory_space<vmem>>, %arg15: memref<2x18x128xf32, #tpu.memory_space<vmem>>) attributes {dimension_semantics = [#tpu.dimension_semantics<arbitrary>], iteration_bounds = array<i64: 1>, scalar_prefetch = 0 : i64, scratch_operands = 2 : i64, tpu.core_type = #tpu.core_type<tc>, window_params = [{pipeline_mode = #tpu.pipeline_mode<synchronous>, transform_indices = @transform_0, window_bounds = array<i64: 2, 16, 64>}, {pipeline_mode = #tpu.pipeline_mode<synchronous>, transform_indices = @transform_1, window_bounds = array<i64: 192, 128>}, {pipeline_mode = #tpu.pipeline_mode<synchronous>, transform_indices = @transform_2, window_bounds = array<i64: 1, 128>}, {pipeline_mode = #tpu.pipeline_mode<synchronous>, transform_indices = @transform_3, window_bounds = array<i64: 384, 128>}, {pipeline_mode = #tpu.pipeline_mode<synchronous>, transform_indices = @transform_4, window_bounds = array<i64: 1, 128>}, {pipeline_mode = #tpu.pipeline_mode<synchronous>, transform_indices = @transform_5, window_bounds = array<i64: 384, 128>}, {pipeline_mode = #tpu.pipeline_mode<synchronous>, transform_indices = @transform_6, window_bounds = array<i64: 1, 128>}, {pipeline_mode = #tpu.pipeline_mode<synchronous>, transform_indices = @transform_7, window_bounds = array<i64: 384, 64>}, {pipeline_mode = #tpu.pipeline_mode<synchronous>, transform_indices = @transform_8, window_bounds = array<i64: 1, 64>}, {pipeline_mode = #tpu.pipeline_mode<synchronous>, transform_indices = @transform_9, window_bounds = array<i64: 32, 128>}, {pipeline_mode = #tpu.pipeline_mode<synchronous>, transform_indices = @transform_10, window_bounds = array<i64: 32, 128>}, {pipeline_mode = #tpu.pipeline_mode<synchronous>, transform_indices = @transform_11, window_bounds = array<i64: 32, 128>}, {pipeline_mode = #tpu.pipeline_mode<synchronous>, transform_indices = @transform_12, window_bounds = array<i64: 16, 128>}]} {
    %cst = arith.constant 0.000000e+00 : f32
    %0 = vector.broadcast %cst : f32 to vector<2x1x64xf32>
    %c0 = arith.constant 0 : index
    %c0_0 = arith.constant 0 : index
    %c0_1 = arith.constant 0 : index
    %1 = vector.load %arg14[%c0, %c0_0, %c0_1] : memref<2x18x64xf32, #tpu.memory_space<vmem>>, vector<2x1x64xf32>
    tpu.vector_store %arg14[%c0, %c0_0, %c0_1], %0 {strides = array<i32>} : memref<2x18x64xf32, #tpu.memory_space<vmem>>, vector<2x1x64xf32>,
    %c0_2 = arith.constant 0 : index
    %c17 = arith.constant 17 : index
    %c0_3 = arith.constant 0 : index
    %2 = vector.load %arg14[%c0_2, %c17, %c0_3] : memref<2x18x64xf32, #tpu.memory_space<vmem>>, vector<2x1x64xf32>
    tpu.vector_store %arg14[%c0_2, %c17, %c0_3], %0 {strides = array<i32>} : memref<2x18x64xf32, #tpu.memory_space<vmem>>, vector<2x1x64xf32>,
    %c0_4 = arith.constant 0 : index
    %c0_5 = arith.constant 0 : index
    %c0_6 = arith.constant 0 : index
    %3 = vector.load %arg1[%c0_4, %c0_5, %c0_6] : memref<2x16x64xf32, #tpu.memory_space<vmem>>, vector<2x16x64xf32>
    %c0_7 = arith.constant 0 : index
    %c1 = arith.constant 1 : index
    %c0_8 = arith.constant 0 : index
    %4 = vector.load %arg14[%c0_7, %c1, %c0_8] : memref<2x18x64xf32, #tpu.memory_space<vmem>>, vector<2x16x64xf32>
    tpu.vector_store %arg14[%c0_7, %c1, %c0_8], %3 {strides = array<i32>} : memref<2x18x64xf32, #tpu.memory_space<vmem>>, vector<2x16x64xf32>,
    %c0_9 = arith.constant 0 : index
    %c0_10 = arith.constant 0 : index
    %c0_11 = arith.constant 0 : index
    %5 = vector.load %arg14[%c0_9, %c0_10, %c0_11] : memref<2x18x64xf32, #tpu.memory_space<vmem>>, vector<2x16x64xf32>
    %6 = vector.shape_cast %5 : vector<2x16x64xf32> to vector<32x64xf32>
    %c0_12 = arith.constant 0 : index
    %c1_13 = arith.constant 1 : index
    %c0_14 = arith.constant 0 : index
    %7 = vector.load %arg14[%c0_12, %c1_13, %c0_14] : memref<2x18x64xf32, #tpu.memory_space<vmem>>, vector<2x16x64xf32>
    %8 = vector.shape_cast %7 : vector<2x16x64xf32> to vector<32x64xf32>
    %c0_15 = arith.constant 0 : index
    %c2 = arith.constant 2 : index
    %c0_16 = arith.constant 0 : index
    %9 = vector.load %arg14[%c0_15, %c2, %c0_16] : memref<2x18x64xf32, #tpu.memory_space<vmem>>, vector<2x16x64xf32>
    %10 = vector.shape_cast %9 : vector<2x16x64xf32> to vector<32x64xf32>
    %11 = tpu.concatenate %6, %8, %10 in 1 : vector<32x64xf32>, vector<32x64xf32>, vector<32x64xf32> -> vector<32x192xf32>
    %c0_17 = arith.constant 0 : index
    %c0_18 = arith.constant 0 : index
    %12 = vector.load %arg2[%c0_17, %c0_18] : memref<192x128xf32, #tpu.memory_space<vmem>>, vector<192x128xf32>
    %cst_19 = arith.constant dense<0.000000e+00> : vector<32x128xf32>
    %13 = tpu.matmul %11, %12, %cst_19 {dimension_numbers = #tpu.dot_dimension_numbers<[1], [0], [0], [1], [0, 0, 1, 1], [], []>} : vector<32x192xf32>, vector<192x128xf32>, vector<32x128xf32> -> vector<32x128xf32>
    %c0_20 = arith.constant 0 : index
    %c0_21 = arith.constant 0 : index
    %14 = vector.load %arg3[%c0_20, %c0_21] : memref<1x128xf32, #tpu.memory_space<vmem>>, vector<1x128xf32>
    %15 = vector.broadcast %14 : vector<1x128xf32> to vector<32x128xf32>
    %16 = arith.addf %13, %15 : vector<32x128xf32>
    %17 = arith.negf %16 : vector<32x128xf32>
    %18 = math.exp %17 : vector<32x128xf32>
    %cst_22 = arith.constant 1.000000e+00 : f32
    %19 = vector.broadcast %cst_22 : f32 to vector<32x128xf32>
    %20 = arith.addf %19, %18 : vector<32x128xf32>
    %21 = arith.divf %19, %20 : vector<32x128xf32>
    %c0_23 = arith.constant 0 : index
    %c0_24 = arith.constant 0 : index
    %22 = vector.load %arg10[%c0_23, %c0_24] : memref<32x128xf32, #tpu.memory_space<vmem>>, vector<32x128xf32>
    tpu.vector_store %arg10[%c0_23, %c0_24], %21 {strides = array<i32>} : memref<32x128xf32, #tpu.memory_space<vmem>>, vector<32x128xf32>,
    %cst_25 = arith.constant 0.000000e+00 : f32
    %23 = vector.broadcast %cst_25 : f32 to vector<2x1x128xf32>
    %c0_26 = arith.constant 0 : index
    %c0_27 = arith.constant 0 : index
    %c0_28 = arith.constant 0 : index
    %24 = vector.load %arg15[%c0_26, %c0_27, %c0_28] : memref<2x18x128xf32, #tpu.memory_space<vmem>>, vector<2x1x128xf32>
    tpu.vector_store %arg15[%c0_26, %c0_27, %c0_28], %23 {strides = array<i32>} : memref<2x18x128xf32, #tpu.memory_space<vmem>>, vector<2x1x128xf32>,
    %c0_29 = arith.constant 0 : index
    %c17_30 = arith.constant 17 : index
    %c0_31 = arith.constant 0 : index
    %25 = vector.load %arg15[%c0_29, %c17_30, %c0_31] : memref<2x18x128xf32, #tpu.memory_space<vmem>>, vector<2x1x128xf32>
    tpu.vector_store %arg15[%c0_29, %c17_30, %c0_31], %23 {strides = array<i32>} : memref<2x18x128xf32, #tpu.memory_space<vmem>>, vector<2x1x128xf32>,
    %26 = vector.shape_cast %21 : vector<32x128xf32> to vector<2x16x128xf32>
    %c0_32 = arith.constant 0 : index
    %c1_33 = arith.constant 1 : index
    %c0_34 = arith.constant 0 : index
    %27 = vector.load %arg15[%c0_32, %c1_33, %c0_34] : memref<2x18x128xf32, #tpu.memory_space<vmem>>, vector<2x16x128xf32>
    tpu.vector_store %arg15[%c0_32, %c1_33, %c0_34], %26 {strides = array<i32>} : memref<2x18x128xf32, #tpu.memory_space<vmem>>, vector<2x16x128xf32>,
    %c0_35 = arith.constant 0 : index
    %c0_36 = arith.constant 0 : index
    %c0_37 = arith.constant 0 : index
    %28 = vector.load %arg15[%c0_35, %c0_36, %c0_37] : memref<2x18x128xf32, #tpu.memory_space<vmem>>, vector<2x16x128xf32>
    %29 = vector.shape_cast %28 : vector<2x16x128xf32> to vector<32x128xf32>
    %c0_38 = arith.constant 0 : index
    %c1_39 = arith.constant 1 : index
    %c0_40 = arith.constant 0 : index
    %30 = vector.load %arg15[%c0_38, %c1_39, %c0_40] : memref<2x18x128xf32, #tpu.memory_space<vmem>>, vector<2x16x128xf32>
    %31 = vector.shape_cast %30 : vector<2x16x128xf32> to vector<32x128xf32>
    %c0_41 = arith.constant 0 : index
    %c2_42 = arith.constant 2 : index
    %c0_43 = arith.constant 0 : index
    %32 = vector.load %arg15[%c0_41, %c2_42, %c0_43] : memref<2x18x128xf32, #tpu.memory_space<vmem>>, vector<2x16x128xf32>
    %33 = vector.shape_cast %32 : vector<2x16x128xf32> to vector<32x128xf32>
    %34 = tpu.concatenate %29, %31, %33 in 1 : vector<32x128xf32>, vector<32x128xf32>, vector<32x128xf32> -> vector<32x384xf32>
    %c0_44 = arith.constant 0 : index
    %c0_45 = arith.constant 0 : index
    %35 = vector.load %arg4[%c0_44, %c0_45] : memref<384x128xf32, #tpu.memory_space<vmem>>, vector<384x128xf32>
    %cst_46 = arith.constant dense<0.000000e+00> : vector<32x128xf32>
    %36 = tpu.matmul %34, %35, %cst_46 {dimension_numbers = #tpu.dot_dimension_numbers<[1], [0], [0], [1], [0, 0, 1, 1], [], []>} : vector<32x384xf32>, vector<384x128xf32>, vector<32x128xf32> -> vector<32x128xf32>
    %c0_47 = arith.constant 0 : index
    %c0_48 = arith.constant 0 : index
    %37 = vector.load %arg5[%c0_47, %c0_48] : memref<1x128xf32, #tpu.memory_space<vmem>>, vector<1x128xf32>
    %38 = vector.broadcast %37 : vector<1x128xf32> to vector<32x128xf32>
    %39 = arith.addf %36, %38 : vector<32x128xf32>
    %40 = arith.negf %39 : vector<32x128xf32>
    %41 = math.exp %40 : vector<32x128xf32>
    %cst_49 = arith.constant 1.000000e+00 : f32
    %42 = vector.broadcast %cst_49 : f32 to vector<32x128xf32>
    %43 = arith.addf %42, %41 : vector<32x128xf32>
    %44 = arith.divf %42, %43 : vector<32x128xf32>
    %c0_50 = arith.constant 0 : index
    %c0_51 = arith.constant 0 : index
    %45 = vector.load %arg11[%c0_50, %c0_51] : memref<32x128xf32, #tpu.memory_space<vmem>>, vector<32x128xf32>
    tpu.vector_store %arg11[%c0_50, %c0_51], %44 {strides = array<i32>} : memref<32x128xf32, #tpu.memory_space<vmem>>, vector<32x128xf32>,
    %46 = vector.shape_cast %44 : vector<32x128xf32> to vector<2x16x128xf32>
    %c0_52 = arith.constant 0 : index
    %c1_53 = arith.constant 1 : index
    %c0_54 = arith.constant 0 : index
    %47 = vector.load %arg15[%c0_52, %c1_53, %c0_54] : memref<2x18x128xf32, #tpu.memory_space<vmem>>, vector<2x16x128xf32>
    tpu.vector_store %arg15[%c0_52, %c1_53, %c0_54], %46 {strides = array<i32>} : memref<2x18x128xf32, #tpu.memory_space<vmem>>, vector<2x16x128xf32>,
    %c0_55 = arith.constant 0 : index
    %c0_56 = arith.constant 0 : index
    %c0_57 = arith.constant 0 : index
    %48 = vector.load %arg15[%c0_55, %c0_56, %c0_57] : memref<2x18x128xf32, #tpu.memory_space<vmem>>, vector<2x16x128xf32>
    %49 = vector.shape_cast %48 : vector<2x16x128xf32> to vector<32x128xf32>
    %c0_58 = arith.constant 0 : index
    %c1_59 = arith.constant 1 : index
    %c0_60 = arith.constant 0 : index
    %50 = vector.load %arg15[%c0_58, %c1_59, %c0_60] : memref<2x18x128xf32, #tpu.memory_space<vmem>>, vector<2x16x128xf32>
    %51 = vector.shape_cast %50 : vector<2x16x128xf32> to vector<32x128xf32>
    %c0_61 = arith.constant 0 : index
    %c2_62 = arith.constant 2 : index
    %c0_63 = arith.constant 0 : index
    %52 = vector.load %arg15[%c0_61, %c2_62, %c0_63] : memref<2x18x128xf32, #tpu.memory_space<vmem>>, vector<2x16x128xf32>
    %53 = vector.shape_cast %52 : vector<2x16x128xf32> to vector<32x128xf32>
    %54 = tpu.concatenate %49, %51, %53 in 1 : vector<32x128xf32>, vector<32x128xf32>, vector<32x128xf32> -> vector<32x384xf32>
    %c0_64 = arith.constant 0 : index
    %c0_65 = arith.constant 0 : index
    %55 = vector.load %arg6[%c0_64, %c0_65] : memref<384x128xf32, #tpu.memory_space<vmem>>, vector<384x128xf32>
    %cst_66 = arith.constant dense<0.000000e+00> : vector<32x128xf32>
    %56 = tpu.matmul %54, %55, %cst_66 {dimension_numbers = #tpu.dot_dimension_numbers<[1], [0], [0], [1], [0, 0, 1, 1], [], []>} : vector<32x384xf32>, vector<384x128xf32>, vector<32x128xf32> -> vector<32x128xf32>
    %c0_67 = arith.constant 0 : index
    %c0_68 = arith.constant 0 : index
    %57 = vector.load %arg7[%c0_67, %c0_68] : memref<1x128xf32, #tpu.memory_space<vmem>>, vector<1x128xf32>
    %58 = vector.broadcast %57 : vector<1x128xf32> to vector<32x128xf32>
    %59 = arith.addf %56, %58 : vector<32x128xf32>
    %60 = arith.negf %59 : vector<32x128xf32>
    %61 = math.exp %60 : vector<32x128xf32>
    %cst_69 = arith.constant 1.000000e+00 : f32
    %62 = vector.broadcast %cst_69 : f32 to vector<32x128xf32>
    %63 = arith.addf %62, %61 : vector<32x128xf32>
    %64 = arith.divf %62, %63 : vector<32x128xf32>
    %c0_70 = arith.constant 0 : index
    %c0_71 = arith.constant 0 : index
    %65 = vector.load %arg12[%c0_70, %c0_71] : memref<32x128xf32, #tpu.memory_space<vmem>>, vector<32x128xf32>
    tpu.vector_store %arg12[%c0_70, %c0_71], %64 {strides = array<i32>} : memref<32x128xf32, #tpu.memory_space<vmem>>, vector<32x128xf32>,
    %66 = vector.shape_cast %64 : vector<32x128xf32> to vector<2x16x128xf32>
    %c0_72 = arith.constant 0 : index
    %c1_73 = arith.constant 1 : index
    %c0_74 = arith.constant 0 : index
    %67 = vector.load %arg15[%c0_72, %c1_73, %c0_74] : memref<2x18x128xf32, #tpu.memory_space<vmem>>, vector<2x16x128xf32>
    tpu.vector_store %arg15[%c0_72, %c1_73, %c0_74], %66 {strides = array<i32>} : memref<2x18x128xf32, #tpu.memory_space<vmem>>, vector<2x16x128xf32>,
    %c0_75 = arith.constant 0 : index
    %c0_76 = arith.constant 0 : index
    %c0_77 = arith.constant 0 : index
    %68 = vector.load %arg15[%c0_75, %c0_76, %c0_77] : memref<2x18x128xf32, #tpu.memory_space<vmem>>, vector<2x16x128xf32>
    %69 = vector.shape_cast %68 : vector<2x16x128xf32> to vector<32x128xf32>
    %c0_78 = arith.constant 0 : index
    %c1_79 = arith.constant 1 : index
    %c0_80 = arith.constant 0 : index
    %70 = vector.load %arg15[%c0_78, %c1_79, %c0_80] : memref<2x18x128xf32, #tpu.memory_space<vmem>>, vector<2x16x128xf32>
    %71 = vector.shape_cast %70 : vector<2x16x128xf32> to vector<32x128xf32>
    %c0_81 = arith.constant 0 : index
    %c2_82 = arith.constant 2 : index
    %c0_83 = arith.constant 0 : index
    %72 = vector.load %arg15[%c0_81, %c2_82, %c0_83] : memref<2x18x128xf32, #tpu.memory_space<vmem>>, vector<2x16x128xf32>
    %73 = vector.shape_cast %72 : vector<2x16x128xf32> to vector<32x128xf32>
    %74 = tpu.concatenate %69, %71, %73 in 1 : vector<32x128xf32>, vector<32x128xf32>, vector<32x128xf32> -> vector<32x384xf32>
    %c0_84 = arith.constant 0 : index
    %c0_85 = arith.constant 0 : index
    %75 = vector.load %arg8[%c0_84, %c0_85] : memref<384x64xf32, #tpu.memory_space<vmem>>, vector<384x64xf32>
    %cst_86 = arith.constant dense<0.000000e+00> : vector<32x64xf32>
    %76 = tpu.matmul %74, %75, %cst_86 {dimension_numbers = #tpu.dot_dimension_numbers<[1], [0], [0], [1], [0, 0, 1, 1], [], []>} : vector<32x384xf32>, vector<384x64xf32>, vector<32x64xf32> -> vector<32x64xf32>
    %c0_87 = arith.constant 0 : index
    %c0_88 = arith.constant 0 : index
    %77 = vector.load %arg9[%c0_87, %c0_88] : memref<1x64xf32, #tpu.memory_space<vmem>>, vector<1x64xf32>
    %78 = vector.broadcast %77 : vector<1x64xf32> to vector<32x64xf32>
    %79 = arith.addf %76, %78 : vector<32x64xf32>
    %80 = arith.negf %79 : vector<32x64xf32>
    %81 = math.exp %80 : vector<32x64xf32>
    %cst_89 = arith.constant 1.000000e+00 : f32
    %82 = vector.broadcast %cst_89 : f32 to vector<32x64xf32>
    %83 = arith.addf %82, %81 : vector<32x64xf32>
    %84 = arith.divf %82, %83 : vector<32x64xf32>
    %85 = vector.extract_strided_slice %84 {offsets = [0, 0], sizes = [16, 64], strides = [1, 1]} : vector<32x64xf32> to vector<16x64xf32>
    %86 = vector.extract_strided_slice %84 {offsets = [16, 0], sizes = [16, 64], strides = [1, 1]} : vector<32x64xf32> to vector<16x64xf32>
    %87 = tpu.concatenate %85, %86 in 1 : vector<16x64xf32>, vector<16x64xf32> -> vector<16x128xf32>
    %c0_90 = arith.constant 0 : index
    %c0_91 = arith.constant 0 : index
    %88 = vector.load %arg13[%c0_90, %c0_91] : memref<16x128xf32, #tpu.memory_space<vmem>>, vector<16x128xf32>
    tpu.vector_store %arg13[%c0_90, %c0_91], %87 {strides = array<i32>} : memref<16x128xf32, #tpu.memory_space<vmem>>, vector<16x128xf32>,
    return
  }
  func.func @transform_0(%arg0: i32) -> (i32, i32, i32) {
    %c0_i32 = arith.constant 0 : i32
    %c0_i32_0 = arith.constant 0 : i32
    %c0_i32_1 = arith.constant 0 : i32
    %c0_i32_2 = arith.constant 0 : i32
    return %c0_i32, %c0_i32_0, %c0_i32_1 : i32, i32, i32
  }
  func.func @transform_1(%arg0: i32) -> (i32, i32) {
    %c0_i32 = arith.constant 0 : i32
    %c0_i32_0 = arith.constant 0 : i32
    %c0_i32_1 = arith.constant 0 : i32
    return %c0_i32, %c0_i32_0 : i32, i32
  }
  func.func @transform_2(%arg0: i32) -> (i32, i32) {
    %c0_i32 = arith.constant 0 : i32
    %c0_i32_0 = arith.constant 0 : i32
    %c0_i32_1 = arith.constant 0 : i32
    return %c0_i32, %c0_i32_0 : i32, i32
  }
  func.func @transform_3(%arg0: i32) -> (i32, i32) {
    %c0_i32 = arith.constant 0 : i32
    %c0_i32_0 = arith.constant 0 : i32
    %c0_i32_1 = arith.constant 0 : i32
    return %c0_i32, %c0_i32_0 : i32, i32
  }
  func.func @transform_4(%arg0: i32) -> (i32, i32) {
    %c0_i32 = arith.constant 0 : i32
    %c0_i32_0 = arith.constant 0 : i32
    %c0_i32_1 = arith.constant 0 : i32
    return %c0_i32, %c0_i32_0 : i32, i32
  }
  func.func @transform_5(%arg0: i32) -> (i32, i32) {
    %c0_i32 = arith.constant 0 : i32
    %c0_i32_0 = arith.constant 0 : i32
    %c0_i32_1 = arith.constant 0 : i32
    return %c0_i32, %c0_i32_0 : i32, i32
  }
  func.func @transform_6(%arg0: i32) -> (i32, i32) {
    %c0_i32 = arith.constant 0 : i32
    %c0_i32_0 = arith.constant 0 : i32
    %c0_i32_1 = arith.constant 0 : i32
    return %c0_i32, %c0_i32_0 : i32, i32
  }
  func.func @transform_7(%arg0: i32) -> (i32, i32) {
    %c0_i32 = arith.constant 0 : i32
    %c0_i32_0 = arith.constant 0 : i32
    %c0_i32_1 = arith.constant 0 : i32
    return %c0_i32, %c0_i32_0 : i32, i32
  }
  func.func @transform_8(%arg0: i32) -> (i32, i32) {
    %c0_i32 = arith.constant 0 : i32
    %c0_i32_0 = arith.constant 0 : i32
    %c0_i32_1 = arith.constant 0 : i32
    return %c0_i32, %c0_i32_0 : i32, i32
  }
  func.func @transform_9(%arg0: i32) -> (i32, i32) {
    %c0_i32 = arith.constant 0 : i32
    %c0_i32_0 = arith.constant 0 : i32
    %c0_i32_1 = arith.constant 0 : i32
    return %c0_i32, %c0_i32_0 : i32, i32
  }
  func.func @transform_10(%arg0: i32) -> (i32, i32) {
    %c0_i32 = arith.constant 0 : i32
    %c0_i32_0 = arith.constant 0 : i32
    %c0_i32_1 = arith.constant 0 : i32
    return %c0_i32, %c0_i32_0 : i32, i32
  }
  func.func @transform_11(%arg0: i32) -> (i32, i32) {
    %c0_i32 = arith.constant 0 : i32
    %c0_i32_0 = arith.constant 0 : i32
    %c0_i32_1 = arith.constant 0 : i32
    return %c0_i32, %c0_i32_0 : i32, i32
  }
  func.func @transform_12(%arg0: i32) -> (i32, i32) {
    %c0_i32 = arith.constant 0 : i32
    %c0_i32_0 = arith.constant 0 : i32
    %c0_i32_1 = arith.constant 0 : i32
    return %c0_i32, %c0_i32_0 : i32, i32
  }
}

</mosaic_0001>

<llo_original>
// kernel: ccn_forward.1
$region0: #{ccn_forward.1}
  #allocation0 [shape = 'u32[]', space=smem, size = 0x4, offset = 0x4, fixed_abs, tag = 'smem constant byte address 0x4 - core index']
  #allocation1 [shape = 'u32[144,128]{1,0:T(1,128)}', space=vmem, size = 0x12000, scoped, tag = 'internal scratch']
  #allocation2 [shape = 'f32[2,18,64]{2,1,0:T(8,128)}', space=vmem, size = 0x6000, scoped, tag = 'scratch operand']
  #allocation3 [shape = 'f32[2,18,128]{2,1,0:T(8,128)}', space=vmem, size = 0x6000, scoped, tag = 'scratch operand']
  %s0 = inlined_call_operand.vmem [shape: f32[2,16,64], index: 0, kind: input, shape index: {}]
  %s1 = inlined_call_operand.hbm [shape: f32[192,128], index: 1, kind: input, shape index: {}]
  %s2 = inlined_call_operand.vmem [shape: f32[1,128], index: 2, kind: input, shape index: {}]
  %s3 = inlined_call_operand.vmem [shape: f32[384,128], index: 3, kind: input, shape index: {}]
  %s4 = inlined_call_operand.vmem [shape: f32[1,128], index: 4, kind: input, shape index: {}]
  %s5 = inlined_call_operand.vmem [shape: f32[384,128], index: 5, kind: input, shape index: {}]
  %s6 = inlined_call_operand.vmem [shape: f32[1,128], index: 6, kind: input, shape index: {}]
  %s7 = inlined_call_operand.vmem [shape: f32[384,64], index: 7, kind: input, shape index: {}]
  %s8 = inlined_call_operand.vmem [shape: f32[1,64], index: 8, kind: input, shape index: {}]
  %s9 = inlined_call_operand.vmem [shape: f32[32,128], index: 9, kind: output, shape index: {0}]
  %s10 = inlined_call_operand.vmem [shape: f32[32,128], index: 10, kind: output, shape index: {1}]
  %s11 = inlined_call_operand.vmem [shape: f32[32,128], index: 11, kind: output, shape index: {2}]
  %s12 = inlined_call_operand.vmem [shape: f32[16,128], index: 12, kind: output, shape index: {3}]
  %13 = xla_tuple %s9, %s10, %s11, %s12
  %s14 = sld [smem:[#allocation0]]
  $region74: #{ccn_forward.1} parent=0
    _
  %s16 = ssub.s32 1, %s14
  %s17 = scalar_select 0, %s16, %s14
  $region1: #{ccn_forward.1} parent=0
    #allocation4 [shape = 'u8[98304]{0}', space=vmem, size = 0x18000, scoped, tag = 'input window, operand 1, single buffered']
    #allocation5 [shape = 's32[1]{0}', space=sflag, size = 0x4, scoped, tag = 'scoped memory for ccn_forward.1']
    %18 = vsyncpa [#allocation5], 0
    // Predicated region
    $region2: #{ccn_forward.1} parent=1 // pred_check
      _
    $region3: #{ccn_forward.1} parent=1 // pred_check_branch
      %20 = sbr.rel (0) target = $region5
    $region4: #{ccn_forward.1} parent=1 // pred_region
      _
    $region5: #{ccn_forward.1} parent=1 // pred_fallthru
      _
    // Predicated region
    $region6: #{ccn_forward.1} parent=1 // pred_check
      _
    $region7: #{ccn_forward.1} parent=1 // pred_check_branch
      %22 = sbr.rel (0) target = $region9
    $region8: #{ccn_forward.1} parent=1 // pred_region
      %s24 = ssub.s32 3072, 3072
      %25 = vsyncadd [#allocation5], %s24
      %s26 = sshll.u32 [#allocation4], 4
      %s27 = int_to_ptr.vmem [resolvable:$true] %s26
      %32 = dma.hbm_to_vmem [thread:$0]  %s1, 3072, %s27, [#allocation5], 128, 128, 8
    $region9: #{ccn_forward.1} parent=1 // pred_fallthru
      _
    // Predicated region
    $region10: #{ccn_forward.1} parent=1 // pred_check
      _
    $region11: #{ccn_forward.1} parent=1 // pred_check_branch
      %34 = sbr.rel (0) target = $region13
    $region12: #{ccn_forward.1} parent=1 // pred_region
      _
    $region13: #{ccn_forward.1} parent=1 // pred_fallthru
      _
    // Predicated region
    $region14: #{ccn_forward.1} parent=1 // pred_check
      _
    $region15: #{ccn_forward.1} parent=1 // pred_check_branch
      %36 = sbr.rel (0) target = $region17
    $region16: #{ccn_forward.1} parent=1 // pred_region
      _
    $region17: #{ccn_forward.1} parent=1 // pred_fallthru
      _
    // Predicated region
    $region18: #{ccn_forward.1} parent=1 // pred_check
      _
    $region19: #{ccn_forward.1} parent=1 // pred_check_branch
      %38 = sbr.rel (0) target = $region21
    $region20: #{ccn_forward.1} parent=1 // pred_region
      _
    $region21: #{ccn_forward.1} parent=1 // pred_fallthru
      _
    // Predicated region
    $region22: #{ccn_forward.1} parent=1 // pred_check
      _
    $region23: #{ccn_forward.1} parent=1 // pred_check_branch
      %40 = sbr.rel (0) target = $region25
    $region24: #{ccn_forward.1} parent=1 // pred_region
      _
    $region25: #{ccn_forward.1} parent=1 // pred_fallthru
      _
    // Predicated region
    $region26: #{ccn_forward.1} parent=1 // pred_check
      _
    $region27: #{ccn_forward.1} parent=1 // pred_check_branch
      %42 = sbr.rel (0) target = $region29
    $region28: #{ccn_forward.1} parent=1 // pred_region
      _
    $region29: #{ccn_forward.1} parent=1 // pred_fallthru
      _
    // Predicated region
    $region30: #{ccn_forward.1} parent=1 // pred_check
      _
    $region31: #{ccn_forward.1} parent=1 // pred_check_branch
      %44 = sbr.rel (0) target = $region33
    $region32: #{ccn_forward.1} parent=1 // pred_region
      _
    $region33: #{ccn_forward.1} parent=1 // pred_fallthru
      _
    // Predicated region
    $region34: #{ccn_forward.1} parent=1 // pred_check
      _
    $region35: #{ccn_forward.1} parent=1 // pred_check_branch
      %46 = sbr.rel (0) target = $region37
    $region36: #{ccn_forward.1} parent=1 // pred_region
      _
    $region37: #{ccn_forward.1} parent=1 // pred_fallthru
      _
    // Predicated region
    $region38: #{ccn_forward.1} parent=1 // pred_check
      _
    $region39: #{ccn_forward.1} parent=1 // pred_check_branch
      %48 = sbr.rel (0) target = $region41
    $region40: #{ccn_forward.1} parent=1 // pred_region
      %49 = dma.done [#allocation5], 3072
    $region41: #{ccn_forward.1} parent=1 // pred_fallthru
      _
    %vm50 = vcmask 516096
    %51 = vst.msk [vmem:[#allocation2] sm:$0x1] %vm50, 0.0
    %52 = vst.msk [vmem:[#allocation2 + $0x18] sm:$0x1] %vm50, 0.0
    %53 = vst.msk [vmem:[#allocation2 + $0x11] sm:$0x1] %vm50, 0.0
    %54 = vst.msk [vmem:[#allocation2 + $0x29] sm:$0x1] %vm50, 0.0
    %v55 = vld [vmem:[%s0] sm:$0xff]
    %v56 = vld [vmem:[%s0 + $0x8] sm:$0xff]
    %v57 = vld [vmem:[%s0 + $0x10] sm:$0xff]
    %v58 = vld [vmem:[%s0 + $0x18] sm:$0xff]
    %vm59 = vcmask 523264
    %60 = vst.msk [vmem:[#allocation2 + $0x1] sm:$0xff] %vm59, %v55
    %61 = vst.msk [vmem:[#allocation2 + $0x9] sm:$0xff] %vm59, %v56
    %62 = vst.msk [vmem:[#allocation2 + $0x19] sm:$0xff] %vm59, %v57
    %63 = vst.msk [vmem:[#allocation2 + $0x21] sm:$0xff] %vm59, %v58
    %v64 = vld [vmem:[#allocation2] sm:$0xff]
    %v65 = vld [vmem:[#allocation2 + $0x8] sm:$0xff]
    %v66 = vld [vmem:[#allocation2 + $0x18] sm:$0xff]
    %v67 = vld [vmem:[#allocation2 + $0x20] sm:$0xff]
    %v68 = vld [vmem:[#allocation2 + $0x1] sm:$0xff]
    %v69 = vld [vmem:[#allocation2 + $0x9] sm:$0xff]
    %v70 = vld [vmem:[#allocation2 + $0x19] sm:$0xff]
    %v71 = vld [vmem:[#allocation2 + $0x21] sm:$0xff]
    %v72 = vld [vmem:[#allocation2 + $0x2] sm:$0xff]
    %v73 = vld [vmem:[#allocation2 + $0xa] sm:$0xff]
    %v74 = vld [vmem:[#allocation2 + $0x1a] sm:$0xff]
    %v75 = vld [vmem:[#allocation2 + $0x22] sm:$0xff]
    %80 = vrot.lane.b32.xlu0 %v68, 64
    %v81 = vpop.permute.xlu0 %80
    %82 = vrot.lane.b32.xlu0 %v69, 64
    %v83 = vpop.permute.xlu0 %82
    %84 = vrot.lane.b32.xlu0 %v70, 64
    %v85 = vpop.permute.xlu0 %84
    %86 = vrot.lane.b32.xlu0 %v71, 64
    %v87 = vpop.permute.xlu0 %86
    %v92 = vsel %vm59, %v64, %v81
    %v93 = vsel %vm59, %v65, %v83
    %v94 = vsel %vm59, %v66, %v85
    %v95 = vsel %vm59, %v67, %v87
    %v96 = vld [vmem:[#allocation4] sm:$0xff]
    %v97 = vld [vmem:[#allocation4 + $0x8] sm:$0xff]
    %v98 = vld [vmem:[#allocation4 + $0x10] sm:$0xff]
    %v99 = vld [vmem:[#allocation4 + $0x18] sm:$0xff]
    %v100 = vld [vmem:[#allocation4 + $0x20] sm:$0xff]
    %v101 = vld [vmem:[#allocation4 + $0x28] sm:$0xff]
    %v102 = vld [vmem:[#allocation4 + $0x30] sm:$0xff]
    %v103 = vld [vmem:[#allocation4 + $0x38] sm:$0xff]
    %v104 = vld [vmem:[#allocation4 + $0x40] sm:$0xff]
    %v105 = vld [vmem:[#allocation4 + $0x48] sm:$0xff]
    %v106 = vld [vmem:[#allocation4 + $0x50] sm:$0xff]
    %v107 = vld [vmem:[#allocation4 + $0x58] sm:$0xff]
    %v108 = vld [vmem:[#allocation4 + $0x60] sm:$0xff]
    %v109 = vld [vmem:[#allocation4 + $0x68] sm:$0xff]
    %v110 = vld [vmem:[#allocation4 + $0x70] sm:$0xff]
    %v111 = vld [vmem:[#allocation4 + $0x78] sm:$0xff]
    %v112 = vld [vmem:[#allocation4 + $0x80] sm:$0xff]
    %v113 = vld [vmem:[#allocation4 + $0x88] sm:$0xff]
    %v114 = vld [vmem:[#allocation4 + $0x90] sm:$0xff]
    %v115 = vld [vmem:[#allocation4 + $0x98] sm:$0xff]
    %v116 = vld [vmem:[#allocation4 + $0xa0] sm:$0xff]
    %v117 = vld [vmem:[#allocation4 + $0xa8] sm:$0xff]
    %v118 = vld [vmem:[#allocation4 + $0xb0] sm:$0xff]
    %v119 = vld [vmem:[#allocation4 + $0xb8] sm:$0xff]
    %v120 = vld [vmem:[%s2] sm:$0x1]
    %v122 = vlaneseq
    %v123 = vshrl.u32 %v122, 7
    %v124 = vsub.s32 0, %v123
    %v125 = vrot.slane %v120, %v124
    %v128 = vsel %vm59, %v72, 0
    %v131 = vsel %vm59, %v73, 0
    %v134 = vsel %vm59, %v74, 0
    %v137 = vsel %vm59, %v75, 0
    %139 = vmatprep.subr.mxu0 0.0
    %140 = vmatpush1.msra.mxu0 %v96
    %141 = vmatprep.subr.mxu0 0.0
    %142 = vmatpush1.msra.mxu0 %v97
    %143 = vmatprep.subr.mxu0 0.0
    %144 = vmatpush1.msra.mxu0 %v98
    %145 = vmatprep.subr.mxu0 0.0
    %146 = vmatpush1.msra.mxu0 %v99
    %147 = vmatprep.subr.mxu0 0.0
    %148 = vmatpush1.msra.mxu0 %v100
    %149 = vmatprep.subr.mxu0 0.0
    %150 = vmatpush1.msra.mxu0 %v101
    %151 = vmatprep.subr.mxu0 0.0
    %152 = vmatpush1.msra.mxu0 %v102
    %153 = vmatprep.subr.mxu0 0.0
    %154 = vmatpush1.msra.mxu0 %v103
    %155 = vmatprep.subr.mxu0 0.0
    %156 = vmatpush1.msra.mxu0 %v104
    %157 = vmatprep.subr.mxu0 0.0
    %158 = vmatpush1.msra.mxu0 %v105
    %159 = vmatprep.subr.mxu0 0.0
    %160 = vmatpush1.msra.mxu0 %v106
    %161 = vmatprep.subr.mxu0 0.0
    %162 = vmatpush1.msra.mxu0 %v107
    %163 = vmatprep.subr.mxu0 0.0
    %164 = vmatpush1.msra.mxu0 %v108
    %165 = vmatprep.subr.mxu0 0.0
    %166 = vmatpush1.msra.mxu0 %v109
    %167 = vmatprep.subr.mxu0 0.0
    %168 = vmatpush1.msra.mxu0 %v110
    %169 = vmatprep.subr.mxu0 0.0
    %170 = vmatpush1.msra.mxu0 %v111
    %171 = vmatprep.subr.mxu0 0.0
    %172 = vmatpush1.msra.mxu0 %v112
    %173 = vmatprep.subr.mxu0 0.0
    %174 = vmatpush1.msra.mxu0 %v113
    %175 = vmatprep.subr.mxu0 0.0
    %176 = vmatpush1.msra.mxu0 %v114
    %177 = vmatprep.subr.mxu0 0.0
    %178 = vmatpush1.msra.mxu0 %v115
    %179 = vmatprep.subr.mxu0 0.0
    %180 = vmatpush1.msra.mxu0 %v116
    %181 = vmatprep.subr.mxu0 0.0
    %182 = vmatpush1.msra.mxu0 %v117
    %183 = vmatprep.subr.mxu0 0.0
    %184 = vmatpush1.msra.mxu0 %v118
    %185 = vmatprep.subr.mxu0 0.0
    %186 = vmatpush1.msra.mxu0 %v119
    %187 = vmatprep.subr.mxu0 0.0
    %188 = vmatpush1.msra.mxu0 0.0
    %189 = vmatprep.subr.mxu0 0.0
    %190 = vmatpush1.msra.mxu0 0.0
    %191 = vmatprep.subr.mxu0 0.0
    %192 = vmatpush1.msra.mxu0 0.0
    %193 = vmatprep.subr.mxu0 0.0
    %194 = vmatpush1.msra.mxu0 0.0
    %195 = vmatprep.subr.mxu0 0.0
    %196 = vmatpush1.msra.mxu0 0.0
    %197 = vmatprep.subr.mxu0 0.0
    %198 = vmatpush1.msra.mxu0 0.0
    %199 = vmatprep.subr.mxu0 0.0
    %200 = vmatpush1.msra.mxu0 0.0
    %201 = vmatprep.subr.mxu0 0.0
    %202 = vmatpush1.msra.mxu0 0.0
    %203 = vmatprep.mubr.f32.mxu0 %v128
    %204 = vmatmul.mubr.f32.gmra.mrb[0].mxu0 %v92
    %v205 = vpop.f32.mrb[0].mxu0
    %v206 = vadd.f32 %v125, %v205
    %v207 = vpop.f32.mrb[0].mxu0
    %208 = vmatprep.mubr.f32.mxu0 %v131
    %209 = vmatmul.mubr.f32.gmra.mrb[0].mxu0 %v93
    %v210 = vpop.f32.mrb[0].mxu0
    %v211 = vadd.f32 %v125, %v210
    %v212 = vpop.f32.mrb[0].mxu0
    %213 = vmatprep.mubr.f32.mxu0 %v134
    %214 = vmatmul.mubr.f32.gmra.mrb[0].mxu0 %v94
    %v215 = vpop.f32.mrb[0].mxu0
    %v216 = vadd.f32 %v125, %v215
    %v217 = vpop.f32.mrb[0].mxu0
    %218 = vmatprep.mubr.f32.mxu0 %v137
    %219 = vmatmul.mubr.f32.gmra.mrb[0].mxu0 %v95
    %v220 = vpop.f32.mrb[0].mxu0
    %v221 = vadd.f32 %v125, %v220
    %v222 = vpop.f32.mrb[0].mxu0
    %223 = vdwg.mxu0
    %v224 = vxor.u32 %v206, 2147483648
    %v225 = vxor.u32 %v211, 2147483648
    %v226 = vxor.u32 %v216, 2147483648
    %v227 = vxor.u32 %v221, 2147483648
    %v228 = vmul.f32 %v224, 1.442695
    %v229 = vpow.pop %v228
    %v230 = vmul.f32 %v225, 1.442695
    %v231 = vpow.pop %v230
    %v232 = vmul.f32 %v226, 1.442695
    %v233 = vpow.pop %v232
    %v234 = vmul.f32 %v227, 1.442695
    %v235 = vpow.pop %v234
    %v236 = vadd.f32 %v229, 1.0
    %v237 = vadd.f32 %v231, 1.0
    %v238 = vadd.f32 %v233, 1.0
    %v239 = vadd.f32 %v235, 1.0
    %v240 = vrcp.pop %v236
    %v241 = vmul.f32 1.0, %v240
    %v242 = vrcp.pop %v237
    %v243 = vmul.f32 1.0, %v242
    %v244 = vrcp.pop %v238
    %v245 = vmul.f32 1.0, %v244
    %v246 = vrcp.pop %v239
    %v247 = vmul.f32 1.0, %v246
    %248 = vst [vmem:[%s9] sm:$0xff] %v241
    %249 = vst [vmem:[%s9 + $0x8] sm:$0xff] %v243
    %250 = vst [vmem:[%s9 + $0x10] sm:$0xff] %v245
    %251 = vst [vmem:[%s9 + $0x18] sm:$0xff] %v247
    %252 = vst [vmem:[#allocation3] sm:$0x1] 0.0
    %253 = vst [vmem:[#allocation3 + $0x18] sm:$0x1] 0.0
    %254 = vst [vmem:[#allocation3 + $0x11] sm:$0x1] 0.0
    %255 = vst [vmem:[#allocation3 + $0x29] sm:$0x1] 0.0
    %256 = vst [vmem:[#allocation3 + $0x1] sm:$0xff] %v241
    %257 = vst [vmem:[#allocation3 + $0x9] sm:$0xff] %v243
    %258 = vst [vmem:[#allocation3 + $0x19] sm:$0xff] %v245
    %259 = vst [vmem:[#allocation3 + $0x21] sm:$0xff] %v247
    %v260 = vld [vmem:[#allocation3] sm:$0xff]
    %v261 = vld [vmem:[#allocation3 + $0x8] sm:$0xff]
    %v262 = vld [vmem:[#allocation3 + $0x18] sm:$0xff]
    %v263 = vld [vmem:[#allocation3 + $0x20] sm:$0xff]
    %v264 = vld [vmem:[#allocation3 + $0x1] sm:$0xff]
    %v265 = vld [vmem:[#allocation3 + $0x9] sm:$0xff]
    %v266 = vld [vmem:[#allocation3 + $0x19] sm:$0xff]
    %v267 = vld [vmem:[#allocation3 + $0x21] sm:$0xff]
    %v268 = vld [vmem:[#allocation3 + $0x2] sm:$0xff]
    %v269 = vld [vmem:[#allocation3 + $0xa] sm:$0xff]
    %v270 = vld [vmem:[#allocation3 + $0x1a] sm:$0xff]
    %v271 = vld [vmem:[#allocation3 + $0x22] sm:$0xff]
    %v272 = vld [vmem:[%s3] sm:$0xff]
    %v273 = vld [vmem:[%s3 + $0x8] sm:$0xff]
    %v274 = vld [vmem:[%s3 + $0x10] sm:$0xff]
    %v275 = vld [vmem:[%s3 + $0x18] sm:$0xff]
    %v276 = vld [vmem:[%s3 + $0x20] sm:$0xff]
    %v277 = vld [vmem:[%s3 + $0x28] sm:$0xff]
    %v278 = vld [vmem:[%s3 + $0x30] sm:$0xff]
    %v279 = vld [vmem:[%s3 + $0x38] sm:$0xff]
    %v280 = vld [vmem:[%s3 + $0x40] sm:$0xff]
    %v281 = vld [vmem:[%s3 + $0x48] sm:$0xff]
    %v282 = vld [vmem:[%s3 + $0x50] sm:$0xff]
    %v283 = vld [vmem:[%s3 + $0x58] sm:$0xff]
    %v284 = vld [vmem:[%s3 + $0x60] sm:$0xff]
    %v285 = vld [vmem:[%s3 + $0x68] sm:$0xff]
    %v286 = vld [vmem:[%s3 + $0x70] sm:$0xff]
    %v287 = vld [vmem:[%s3 + $0x78] sm:$0xff]
    %v288 = vld [vmem:[%s3 + $0x80] sm:$0xff]
    %v289 = vld [vmem:[%s3 + $0x88] sm:$0xff]
    %v290 = vld [vmem:[%s3 + $0x90] sm:$0xff]
    %v291 = vld [vmem:[%s3 + $0x98] sm:$0xff]
    %v292 = vld [vmem:[%s3 + $0xa0] sm:$0xff]
    %v293 = vld [vmem:[%s3 + $0xa8] sm:$0xff]
    %v294 = vld [vmem:[%s3 + $0xb0] sm:$0xff]
    %v295 = vld [vmem:[%s3 + $0xb8] sm:$0xff]
    %v296 = vld [vmem:[%s3 + $0xc0] sm:$0xff]
    %v297 = vld [vmem:[%s3 + $0xc8] sm:$0xff]
    %v298 = vld [vmem:[%s3 + $0xd0] sm:$0xff]
    %v299 = vld [vmem:[%s3 + $0xd8] sm:$0xff]
    %v300 = vld [vmem:[%s3 + $0xe0] sm:$0xff]
    %v301 = vld [vmem:[%s3 + $0xe8] sm:$0xff]
    %v302 = vld [vmem:[%s3 + $0xf0] sm:$0xff]
    %v303 = vld [vmem:[%s3 + $0xf8] sm:$0xff]
    %v304 = vld [vmem:[%s3 + $0x100] sm:$0xff]
    %v305 = vld [vmem:[%s3 + $0x108] sm:$0xff]
    %v306 = vld [vmem:[%s3 + $0x110] sm:$0xff]
    %v307 = vld [vmem:[%s3 + $0x118] sm:$0xff]
    %v308 = vld [vmem:[%s3 + $0x120] sm:$0xff]
    %v309 = vld [vmem:[%s3 + $0x128] sm:$0xff]
    %v310 = vld [vmem:[%s3 + $0x130] sm:$0xff]
    %v311 = vld [vmem:[%s3 + $0x138] sm:$0xff]
    %v312 = vld [vmem:[%s3 + $0x140] sm:$0xff]
    %v313 = vld [vmem:[%s3 + $0x148] sm:$0xff]
    %v314 = vld [vmem:[%s3 + $0x150] sm:$0xff]
    %v315 = vld [vmem:[%s3 + $0x158] sm:$0xff]
    %v316 = vld [vmem:[%s3 + $0x160] sm:$0xff]
    %v317 = vld [vmem:[%s3 + $0x168] sm:$0xff]
    %v318 = vld [vmem:[%s3 + $0x170] sm:$0xff]
    %v319 = vld [vmem:[%s3 + $0x178] sm:$0xff]
    %v320 = vld [vmem:[%s4] sm:$0x1]
    %v322 = vlaneseq
    %v323 = vshrl.u32 %v322, 7
    %v324 = vsub.s32 0, %v323
    %v325 = vrot.slane %v320, %v324
    %327 = vmatprep.subr.mxu0 0.0
    %328 = vmatpush1.msra.mxu0 %v272
    %329 = vmatprep.subr.mxu0 0.0
    %330 = vmatpush1.msra.mxu0 %v273
    %331 = vmatprep.subr.mxu0 0.0
    %332 = vmatpush1.msra.mxu0 %v274
    %333 = vmatprep.subr.mxu0 0.0
    %334 = vmatpush1.msra.mxu0 %v275
    %335 = vmatprep.subr.mxu0 0.0
    %336 = vmatpush1.msra.mxu0 %v276
    %337 = vmatprep.subr.mxu0 0.0
    %338 = vmatpush1.msra.mxu0 %v277
    %339 = vmatprep.subr.mxu0 0.0
    %340 = vmatpush1.msra.mxu0 %v278
    %341 = vmatprep.subr.mxu0 0.0
    %342 = vmatpush1.msra.mxu0 %v279
    %343 = vmatprep.subr.mxu0 0.0
    %344 = vmatpush1.msra.mxu0 %v280
    %345 = vmatprep.subr.mxu0 0.0
    %346 = vmatpush1.msra.mxu0 %v281
    %347 = vmatprep.subr.mxu0 0.0
    %348 = vmatpush1.msra.mxu0 %v282
    %349 = vmatprep.subr.mxu0 0.0
    %350 = vmatpush1.msra.mxu0 %v283
    %351 = vmatprep.subr.mxu0 0.0
    %352 = vmatpush1.msra.mxu0 %v284
    %353 = vmatprep.subr.mxu0 0.0
    %354 = vmatpush1.msra.mxu0 %v285
    %355 = vmatprep.subr.mxu0 0.0
    %356 = vmatpush1.msra.mxu0 %v286
    %357 = vmatprep.subr.mxu0 0.0
    %358 = vmatpush1.msra.mxu0 %v287
    %359 = vmatprep.subr.mxu0 0.0
    %360 = vmatpush1.msra.mxu0 %v288
    %361 = vmatprep.subr.mxu0 0.0
    %362 = vmatpush1.msra.mxu0 %v289
    %363 = vmatprep.subr.mxu0 0.0
    %364 = vmatpush1.msra.mxu0 %v290
    %365 = vmatprep.subr.mxu0 0.0
    %366 = vmatpush1.msra.mxu0 %v291
    %367 = vmatprep.subr.mxu0 0.0
    %368 = vmatpush1.msra.mxu0 %v292
    %369 = vmatprep.subr.mxu0 0.0
    %370 = vmatpush1.msra.mxu0 %v293
    %371 = vmatprep.subr.mxu0 0.0
    %372 = vmatpush1.msra.mxu0 %v294
    %373 = vmatprep.subr.mxu0 0.0
    %374 = vmatpush1.msra.mxu0 %v295
    %375 = vmatprep.subr.mxu0 0.0
    %376 = vmatpush1.msra.mxu0 %v296
    %377 = vmatprep.subr.mxu0 0.0
    %378 = vmatpush1.msra.mxu0 %v297
    %379 = vmatprep.subr.mxu0 0.0
    %380 = vmatpush1.msra.mxu0 %v298
    %381 = vmatprep.subr.mxu0 0.0
    %382 = vmatpush1.msra.mxu0 %v299
    %383 = vmatprep.subr.mxu0 0.0
    %384 = vmatpush1.msra.mxu0 %v300
    %385 = vmatprep.subr.mxu0 0.0
    %386 = vmatpush1.msra.mxu0 %v301
    %387 = vmatprep.subr.mxu0 0.0
    %388 = vmatpush1.msra.mxu0 %v302
    %389 = vmatprep.subr.mxu0 0.0
    %390 = vmatpush1.msra.mxu0 %v303
    %391 = vmatprep.mubr.f32.mxu0 %v264
    %392 = vmatmul.mubr.f32.gmra.mrb[0].mxu0 %v260
    %v393 = vpop.f32.mrb[0].mxu0
    %v394 = vadd.f32 %v325, %v393
    %v395 = vpop.f32.mrb[0].mxu0
    %396 = vmatprep.mubr.f32.mxu0 %v265
    %397 = vmatmul.mubr.f32.gmra.mrb[0].mxu0 %v261
    %v398 = vpop.f32.mrb[0].mxu0
    %v399 = vadd.f32 %v325, %v398
    %v400 = vpop.f32.mrb[0].mxu0
    %401 = vmatprep.mubr.f32.mxu0 %v266
    %402 = vmatmul.mubr.f32.gmra.mrb[0].mxu0 %v262
    %v403 = vpop.f32.mrb[0].mxu0
    %v404 = vadd.f32 %v325, %v403
    %v405 = vpop.f32.mrb[0].mxu0
    %406 = vmatprep.mubr.f32.mxu0 %v267
    %407 = vmatmul.mubr.f32.gmra.mrb[0].mxu0 %v263
    %v408 = vpop.f32.mrb[0].mxu0
    %v409 = vadd.f32 %v325, %v408
    %v410 = vpop.f32.mrb[0].mxu0
    %411 = vdwg.mxu0
    %412 = vmatprep.subr.mxu0 0.0
    %413 = vmatpush1.msra.mxu0 %v304
    %414 = vmatprep.subr.mxu0 0.0
    %415 = vmatpush1.msra.mxu0 %v305
    %416 = vmatprep.subr.mxu0 0.0
    %417 = vmatpush1.msra.mxu0 %v306
    %418 = vmatprep.subr.mxu0 0.0
    %419 = vmatpush1.msra.mxu0 %v307
    %420 = vmatprep.subr.mxu0 0.0
    %421 = vmatpush1.msra.mxu0 %v308
    %422 = vmatprep.subr.mxu0 0.0
    %423 = vmatpush1.msra.mxu0 %v309
    %424 = vmatprep.subr.mxu0 0.0
    %425 = vmatpush1.msra.mxu0 %v310
    %426 = vmatprep.subr.mxu0 0.0
    %427 = vmatpush1.msra.mxu0 %v311
    %428 = vmatprep.subr.mxu0 0.0
    %429 = vmatpush1.msra.mxu0 %v312
    %430 = vmatprep.subr.mxu0 0.0
    %431 = vmatpush1.msra.mxu0 %v313
    %432 = vmatprep.subr.mxu0 0.0
    %433 = vmatpush1.msra.mxu0 %v314
    %434 = vmatprep.subr.mxu0 0.0
    %435 = vmatpush1.msra.mxu0 %v315
    %436 = vmatprep.subr.mxu0 0.0
    %437 = vmatpush1.msra.mxu0 %v316
    %438 = vmatprep.subr.mxu0 0.0
    %439 = vmatpush1.msra.mxu0 %v317
    %440 = vmatprep.subr.mxu0 0.0
    %441 = vmatpush1.msra.mxu0 %v318
    %442 = vmatprep.subr.mxu0 0.0
    %443 = vmatpush1.msra.mxu0 %v319
    %444 = vmatprep.subr.mxu0 0.0
    %445 = vmatpush1.msra.mxu0 0.0
    %446 = vmatprep.subr.mxu0 0.0
    %447 = vmatpush1.msra.mxu0 0.0
    %448 = vmatprep.subr.mxu0 0.0
    %449 = vmatpush1.msra.mxu0 0.0
    %450 = vmatprep.subr.mxu0 0.0
    %451 = vmatpush1.msra.mxu0 0.0
    %452 = vmatprep.subr.mxu0 0.0
    %453 = vmatpush1.msra.mxu0 0.0
    %454 = vmatprep.subr.mxu0 0.0
    %455 = vmatpush1.msra.mxu0 0.0
    %456 = vmatprep.subr.mxu0 0.0
    %457 = vmatpush1.msra.mxu0 0.0
    %458 = vmatprep.subr.mxu0 0.0
    %459 = vmatpush1.msra.mxu0 0.0
    %460 = vmatprep.subr.mxu0 0.0
    %461 = vmatpush1.msra.mxu0 0.0
    %462 = vmatprep.subr.mxu0 0.0
    %463 = vmatpush1.msra.mxu0 0.0
    %464 = vmatprep.subr.mxu0 0.0
    %465 = vmatpush1.msra.mxu0 0.0
    %466 = vmatprep.subr.mxu0 0.0
    %467 = vmatpush1.msra.mxu0 0.0
    %468 = vmatprep.subr.mxu0 0.0
    %469 = vmatpush1.msra.mxu0 0.0
    %470 = vmatprep.subr.mxu0 0.0
    %471 = vmatpush1.msra.mxu0 0.0
    %472 = vmatprep.subr.mxu0 0.0
    %473 = vmatpush1.msra.mxu0 0.0
    %474 = vmatprep.subr.mxu0 0.0
    %475 = vmatpush1.msra.mxu0 0.0
    %476 = vmatprep.mubr.f32.mxu0 0.0
    %477 = vmatmul.mubr.f32.gmra.mrb[0].mxu0 %v268
    %v478 = vpop.f32.mrb[0].mxu0
    %v479 = vadd.f32 %v394, %v478
    %v480 = vpop.f32.mrb[0].mxu0
    %481 = vmatprep.mubr.f32.mxu0 0.0
    %482 = vmatmul.mubr.f32.gmra.mrb[0].mxu0 %v269
    %v483 = vpop.f32.mrb[0].mxu0
    %v484 = vadd.f32 %v399, %v483
    %v485 = vpop.f32.mrb[0].mxu0
    %486 = vmatprep.mubr.f32.mxu0 0.0
    %487 = vmatmul.mubr.f32.gmra.mrb[0].mxu0 %v270
    %v488 = vpop.f32.mrb[0].mxu0
    %v489 = vadd.f32 %v404, %v488
    %v490 = vpop.f32.mrb[0].mxu0
    %491 = vmatprep.mubr.f32.mxu0 0.0
    %492 = vmatmul.mubr.f32.gmra.mrb[0].mxu0 %v271
    %v493 = vpop.f32.mrb[0].mxu0
    %v494 = vadd.f32 %v409, %v493
    %v495 = vpop.f32.mrb[0].mxu0
    %496 = vdwg.mxu0
    %v497 = vxor.u32 %v479, 2147483648
    %v498 = vxor.u32 %v484, 2147483648
    %v499 = vxor.u32 %v489, 2147483648
    %v500 = vxor.u32 %v494, 2147483648
    %v501 = vmul.f32 %v497, 1.442695
    %v502 = vpow.pop %v501
    %v503 = vmul.f32 %v498, 1.442695
    %v504 = vpow.pop %v503
    %v505 = vmul.f32 %v499, 1.442695
    %v506 = vpow.pop %v505
    %v507 = vmul.f32 %v500, 1.442695
    %v508 = vpow.pop %v507
    %v509 = vadd.f32 %v502, 1.0
    %v510 = vadd.f32 %v504, 1.0
    %v511 = vadd.f32 %v506, 1.0
    %v512 = vadd.f32 %v508, 1.0
    %v513 = vrcp.pop %v509
    %v514 = vmul.f32 1.0, %v513
    %v515 = vrcp.pop %v510
    %v516 = vmul.f32 1.0, %v515
    %v517 = vrcp.pop %v511
    %v518 = vmul.f32 1.0, %v517
    %v519 = vrcp.pop %v512
    %v520 = vmul.f32 1.0, %v519
    %521 = vst [vmem:[%s10] sm:$0xff] %v514
    %522 = vst [vmem:[%s10 + $0x8] sm:$0xff] %v516
    %523 = vst [vmem:[%s10 + $0x10] sm:$0xff] %v518
    %524 = vst [vmem:[%s10 + $0x18] sm:$0xff] %v520
    %525 = vst [vmem:[#allocation3 + $0x1] sm:$0xff] %v514
    %526 = vst [vmem:[#allocation3 + $0x9] sm:$0xff] %v516
    %527 = vst [vmem:[#allocation3 + $0x19] sm:$0xff] %v518
    %528 = vst [vmem:[#allocation3 + $0x21] sm:$0xff] %v520
    %v529 = vld [vmem:[#allocation3] sm:$0xff]
    %v530 = vld [vmem:[#allocation3 + $0x8] sm:$0xff]
    %v531 = vld [vmem:[#allocation3 + $0x18] sm:$0xff]
    %v532 = vld [vmem:[#allocation3 + $0x20] sm:$0xff]
    %v533 = vld [vmem:[#allocation3 + $0x1] sm:$0xff]
    %v534 = vld [vmem:[#allocation3 + $0x9] sm:$0xff]
    %v535 = vld [vmem:[#allocation3 + $0x19] sm:$0xff]
    %v536 = vld [vmem:[#allocation3 + $0x21] sm:$0xff]
    %v537 = vld [vmem:[#allocation3 + $0x2] sm:$0xff]
    %v538 = vld [vmem:[#allocation3 + $0xa] sm:$0xff]
    %v539 = vld [vmem:[#allocation3 + $0x1a] sm:$0xff]
    %v540 = vld [vmem:[#allocation3 + $0x22] sm:$0xff]
    %v541 = vld [vmem:[%s5] sm:$0xff]
    %v542 = vld [vmem:[%s5 + $0x8] sm:$0xff]
    %v543 = vld [vmem:[%s5 + $0x10] sm:$0xff]
    %v544 = vld [vmem:[%s5 + $0x18] sm:$0xff]
    %v545 = vld [vmem:[%s5 + $0x20] sm:$0xff]
    %v546 = vld [vmem:[%s5 + $0x28] sm:$0xff]
    %v547 = vld [vmem:[%s5 + $0x30] sm:$0xff]
    %v548 = vld [vmem:[%s5 + $0x38] sm:$0xff]
    %v549 = vld [vmem:[%s5 + $0x40] sm:$0xff]
    %v550 = vld [vmem:[%s5 + $0x48] sm:$0xff]
    %v551 = vld [vmem:[%s5 + $0x50] sm:$0xff]
    %v552 = vld [vmem:[%s5 + $0x58] sm:$0xff]
    %v553 = vld [vmem:[%s5 + $0x60] sm:$0xff]
    %v554 = vld [vmem:[%s5 + $0x68] sm:$0xff]
    %v555 = vld [vmem:[%s5 + $0x70] sm:$0xff]
    %v556 = vld [vmem:[%s5 + $0x78] sm:$0xff]
    %v557 = vld [vmem:[%s5 + $0x80] sm:$0xff]
    %v558 = vld [vmem:[%s5 + $0x88] sm:$0xff]
    %v559 = vld [vmem:[%s5 + $0x90] sm:$0xff]
    %v560 = vld [vmem:[%s5 + $0x98] sm:$0xff]
    %v561 = vld [vmem:[%s5 + $0xa0] sm:$0xff]
    %v562 = vld [vmem:[%s5 + $0xa8] sm:$0xff]
    %v563 = vld [vmem:[%s5 + $0xb0] sm:$0xff]
    %v564 = vld [vmem:[%s5 + $0xb8] sm:$0xff]
    %v565 = vld [vmem:[%s5 + $0xc0] sm:$0xff]
    %v566 = vld [vmem:[%s5 + $0xc8] sm:$0xff]
    %v567 = vld [vmem:[%s5 + $0xd0] sm:$0xff]
    %v568 = vld [vmem:[%s5 + $0xd8] sm:$0xff]
    %v569 = vld [vmem:[%s5 + $0xe0] sm:$0xff]
    %v570 = vld [vmem:[%s5 + $0xe8] sm:$0xff]
    %v571 = vld [vmem:[%s5 + $0xf0] sm:$0xff]
    %v572 = vld [vmem:[%s5 + $0xf8] sm:$0xff]
    %v573 = vld [vmem:[%s5 + $0x100] sm:$0xff]
    %v574 = vld [vmem:[%s5 + $0x108] sm:$0xff]
    %v575 = vld [vmem:[%s5 + $0x110] sm:$0xff]
    %v576 = vld [vmem:[%s5 + $0x118] sm:$0xff]
    %v577 = vld [vmem:[%s5 + $0x120] sm:$0xff]
    %v578 = vld [vmem:[%s5 + $0x128] sm:$0xff]
    %v579 = vld [vmem:[%s5 + $0x130] sm:$0xff]
    %v580 = vld [vmem:[%s5 + $0x138] sm:$0xff]
    %v581 = vld [vmem:[%s5 + $0x140] sm:$0xff]
    %v582 = vld [vmem:[%s5 + $0x148] sm:$0xff]
    %v583 = vld [vmem:[%s5 + $0x150] sm:$0xff]
    %v584 = vld [vmem:[%s5 + $0x158] sm:$0xff]
    %v585 = vld [vmem:[%s5 + $0x160] sm:$0xff]
    %v586 = vld [vmem:[%s5 + $0x168] sm:$0xff]
    %v587 = vld [vmem:[%s5 + $0x170] sm:$0xff]
    %v588 = vld [vmem:[%s5 + $0x178] sm:$0xff]
    %v589 = vld [vmem:[%s6] sm:$0x1]
    %v591 = vlaneseq
    %v592 = vshrl.u32 %v591, 7
    %v593 = vsub.s32 0, %v592
    %v594 = vrot.slane %v589, %v593
    %596 = vmatprep.subr.mxu0 0.0
    %597 = vmatpush1.msra.mxu0 %v541
    %598 = vmatprep.subr.mxu0 0.0
    %599 = vmatpush1.msra.mxu0 %v542
    %600 = vmatprep.subr.mxu0 0.0
    %601 = vmatpush1.msra.mxu0 %v543
    %602 = vmatprep.subr.mxu0 0.0
    %603 = vmatpush1.msra.mxu0 %v544
    %604 = vmatprep.subr.mxu0 0.0
    %605 = vmatpush1.msra.mxu0 %v545
    %606 = vmatprep.subr.mxu0 0.0
    %607 = vmatpush1.msra.mxu0 %v546
    %608 = vmatprep.subr.mxu0 0.0
    %609 = vmatpush1.msra.mxu0 %v547
    %610 = vmatprep.subr.mxu0 0.0
    %611 = vmatpush1.msra.mxu0 %v548
    %612 = vmatprep.subr.mxu0 0.0
    %613 = vmatpush1.msra.mxu0 %v549
    %614 = vmatprep.subr.mxu0 0.0
    %615 = vmatpush1.msra.mxu0 %v550
    %616 = vmatprep.subr.mxu0 0.0
    %617 = vmatpush1.msra.mxu0 %v551
    %618 = vmatprep.subr.mxu0 0.0
    %619 = vmatpush1.msra.mxu0 %v552
    %620 = vmatprep.subr.mxu0 0.0
    %621 = vmatpush1.msra.mxu0 %v553
    %622 = vmatprep.subr.mxu0 0.0
    %623 = vmatpush1.msra.mxu0 %v554
    %624 = vmatprep.subr.mxu0 0.0
    %625 = vmatpush1.msra.mxu0 %v555
    %626 = vmatprep.subr.mxu0 0.0
    %627 = vmatpush1.msra.mxu0 %v556
    %628 = vmatprep.subr.mxu0 0.0
    %629 = vmatpush1.msra.mxu0 %v557
    %630 = vmatprep.subr.mxu0 0.0
    %631 = vmatpush1.msra.mxu0 %v558
    %632 = vmatprep.subr.mxu0 0.0
    %633 = vmatpush1.msra.mxu0 %v559
    %634 = vmatprep.subr.mxu0 0.0
    %635 = vmatpush1.msra.mxu0 %v560
    %636 = vmatprep.subr.mxu0 0.0
    %637 = vmatpush1.msra.mxu0 %v561
    %638 = vmatprep.subr.mxu0 0.0
    %639 = vmatpush1.msra.mxu0 %v562
    %640 = vmatprep.subr.mxu0 0.0
    %641 = vmatpush1.msra.mxu0 %v563
    %642 = vmatprep.subr.mxu0 0.0
    %643 = vmatpush1.msra.mxu0 %v564
    %644 = vmatprep.subr.mxu0 0.0
    %645 = vmatpush1.msra.mxu0 %v565
    %646 = vmatprep.subr.mxu0 0.0
    %647 = vmatpush1.msra.mxu0 %v566
    %648 = vmatprep.subr.mxu0 0.0
    %649 = vmatpush1.msra.mxu0 %v567
    %650 = vmatprep.subr.mxu0 0.0
    %651 = vmatpush1.msra.mxu0 %v568
    %652 = vmatprep.subr.mxu0 0.0
    %653 = vmatpush1.msra.mxu0 %v569
    %654 = vmatprep.subr.mxu0 0.0
    %655 = vmatpush1.msra.mxu0 %v570
    %656 = vmatprep.subr.mxu0 0.0
    %657 = vmatpush1.msra.mxu0 %v571
    %658 = vmatprep.subr.mxu0 0.0
    %659 = vmatpush1.msra.mxu0 %v572
    %660 = vmatprep.mubr.f32.mxu0 %v533
    %661 = vmatmul.mubr.f32.gmra.mrb[0].mxu0 %v529
    %v662 = vpop.f32.mrb[0].mxu0
    %v663 = vadd.f32 %v594, %v662
    %v664 = vpop.f32.mrb[0].mxu0
    %665 = vmatprep.mubr.f32.mxu0 %v534
    %666 = vmatmul.mubr.f32.gmra.mrb[0].mxu0 %v530
    %v667 = vpop.f32.mrb[0].mxu0
    %v668 = vadd.f32 %v594, %v667
    %v669 = vpop.f32.mrb[0].mxu0
    %670 = vmatprep.mubr.f32.mxu0 %v535
    %671 = vmatmul.mubr.f32.gmra.mrb[0].mxu0 %v531
    %v672 = vpop.f32.mrb[0].mxu0
    %v673 = vadd.f32 %v594, %v672
    %v674 = vpop.f32.mrb[0].mxu0
    %675 = vmatprep.mubr.f32.mxu0 %v536
    %676 = vmatmul.mubr.f32.gmra.mrb[0].mxu0 %v532
    %v677 = vpop.f32.mrb[0].mxu0
    %v678 = vadd.f32 %v594, %v677
    %v679 = vpop.f32.mrb[0].mxu0
    %680 = vdwg.mxu0
    %681 = vmatprep.subr.mxu0 0.0
    %682 = vmatpush1.msra.mxu0 %v573
    %683 = vmatprep.subr.mxu0 0.0
    %684 = vmatpush1.msra.mxu0 %v574
    %685 = vmatprep.subr.mxu0 0.0
    %686 = vmatpush1.msra.mxu0 %v575
    %687 = vmatprep.subr.mxu0 0.0
    %688 = vmatpush1.msra.mxu0 %v576
    %689 = vmatprep.subr.mxu0 0.0
    %690 = vmatpush1.msra.mxu0 %v577
    %691 = vmatprep.subr.mxu0 0.0
    %692 = vmatpush1.msra.mxu0 %v578
    %693 = vmatprep.subr.mxu0 0.0
    %694 = vmatpush1.msra.mxu0 %v579
    %695 = vmatprep.subr.mxu0 0.0
    %696 = vmatpush1.msra.mxu0 %v580
    %697 = vmatprep.subr.mxu0 0.0
    %698 = vmatpush1.msra.mxu0 %v581
    %699 = vmatprep.subr.mxu0 0.0
    %700 = vmatpush1.msra.mxu0 %v582
    %701 = vmatprep.subr.mxu0 0.0
    %702 = vmatpush1.msra.mxu0 %v583
    %703 = vmatprep.subr.mxu0 0.0
    %704 = vmatpush1.msra.mxu0 %v584
    %705 = vmatprep.subr.mxu0 0.0
    %706 = vmatpush1.msra.mxu0 %v585
    %707 = vmatprep.subr.mxu0 0.0
    %708 = vmatpush1.msra.mxu0 %v586
    %709 = vmatprep.subr.mxu0 0.0
    %710 = vmatpush1.msra.mxu0 %v587
    %711 = vmatprep.subr.mxu0 0.0
    %712 = vmatpush1.msra.mxu0 %v588
    %713 = vmatprep.subr.mxu0 0.0
    %714 = vmatpush1.msra.mxu0 0.0
    %715 = vmatprep.subr.mxu0 0.0
    %716 = vmatpush1.msra.mxu0 0.0
    %717 = vmatprep.subr.mxu0 0.0
    %718 = vmatpush1.msra.mxu0 0.0
    %719 = vmatprep.subr.mxu0 0.0
    %720 = vmatpush1.msra.mxu0 0.0
    %721 = vmatprep.subr.mxu0 0.0
    %722 = vmatpush1.msra.mxu0 0.0
    %723 = vmatprep.subr.mxu0 0.0
    %724 = vmatpush1.msra.mxu0 0.0
    %725 = vmatprep.subr.mxu0 0.0
    %726 = vmatpush1.msra.mxu0 0.0
    %727 = vmatprep.subr.mxu0 0.0
    %728 = vmatpush1.msra.mxu0 0.0
    %729 = vmatprep.subr.mxu0 0.0
    %730 = vmatpush1.msra.mxu0 0.0
    %731 = vmatprep.subr.mxu0 0.0
    %732 = vmatpush1.msra.mxu0 0.0
    %733 = vmatprep.subr.mxu0 0.0
    %734 = vmatpush1.msra.mxu0 0.0
    %735 = vmatprep.subr.mxu0 0.0
    %736 = vmatpush1.msra.mxu0 0.0
    %737 = vmatprep.subr.mxu0 0.0
    %738 = vmatpush1.msra.mxu0 0.0
    %739 = vmatprep.subr.mxu0 0.0
    %740 = vmatpush1.msra.mxu0 0.0
    %741 = vmatprep.subr.mxu0 0.0
    %742 = vmatpush1.msra.mxu0 0.0
    %743 = vmatprep.subr.mxu0 0.0
    %744 = vmatpush1.msra.mxu0 0.0
    %745 = vmatprep.mubr.f32.mxu0 0.0
    %746 = vmatmul.mubr.f32.gmra.mrb[0].mxu0 %v537
    %v747 = vpop.f32.mrb[0].mxu0
    %v748 = vadd.f32 %v663, %v747
    %v749 = vpop.f32.mrb[0].mxu0
    %750 = vmatprep.mubr.f32.mxu0 0.0
    %751 = vmatmul.mubr.f32.gmra.mrb[0].mxu0 %v538
    %v752 = vpop.f32.mrb[0].mxu0
    %v753 = vadd.f32 %v668, %v752
    %v754 = vpop.f32.mrb[0].mxu0
    %755 = vmatprep.mubr.f32.mxu0 0.0
    %756 = vmatmul.mubr.f32.gmra.mrb[0].mxu0 %v539
    %v757 = vpop.f32.mrb[0].mxu0
    %v758 = vadd.f32 %v673, %v757
    %v759 = vpop.f32.mrb[0].mxu0
    %760 = vmatprep.mubr.f32.mxu0 0.0
    %761 = vmatmul.mubr.f32.gmra.mrb[0].mxu0 %v540
    %v762 = vpop.f32.mrb[0].mxu0
    %v763 = vadd.f32 %v678, %v762
    %v764 = vpop.f32.mrb[0].mxu0
    %765 = vdwg.mxu0
    %v766 = vxor.u32 %v748, 2147483648
    %v767 = vxor.u32 %v753, 2147483648
    %v768 = vxor.u32 %v758, 2147483648
    %v769 = vxor.u32 %v763, 2147483648
    %v770 = vmul.f32 %v766, 1.442695
    %v771 = vpow.pop %v770
    %v772 = vmul.f32 %v767, 1.442695
    %v773 = vpow.pop %v772
    %v774 = vmul.f32 %v768, 1.442695
    %v775 = vpow.pop %v774
    %v776 = vmul.f32 %v769, 1.442695
    %v777 = vpow.pop %v776
    %v778 = vadd.f32 %v771, 1.0
    %v779 = vadd.f32 %v773, 1.0
    %v780 = vadd.f32 %v775, 1.0
    %v781 = vadd.f32 %v777, 1.0
    %v782 = vrcp.pop %v778
    %v783 = vmul.f32 1.0, %v782
    %v784 = vrcp.pop %v779
    %v785 = vmul.f32 1.0, %v784
    %v786 = vrcp.pop %v780
    %v787 = vmul.f32 1.0, %v786
    %v788 = vrcp.pop %v781
    %v789 = vmul.f32 1.0, %v788
    %790 = vst [vmem:[%s11] sm:$0xff] %v783
    %791 = vst [vmem:[%s11 + $0x8] sm:$0xff] %v785
    %792 = vst [vmem:[%s11 + $0x10] sm:$0xff] %v787
    %793 = vst [vmem:[%s11 + $0x18] sm:$0xff] %v789
    %794 = vst [vmem:[#allocation3 + $0x1] sm:$0xff] %v783
    %795 = vst [vmem:[#allocation3 + $0x9] sm:$0xff] %v785
    %796 = vst [vmem:[#allocation3 + $0x19] sm:$0xff] %v787
    %797 = vst [vmem:[#allocation3 + $0x21] sm:$0xff] %v789
    %v798 = vld [vmem:[#allocation3] sm:$0xff]
    %v799 = vld [vmem:[#allocation3 + $0x8] sm:$0xff]
    %v800 = vld [vmem:[#allocation3 + $0x18] sm:$0xff]
    %v801 = vld [vmem:[#allocation3 + $0x20] sm:$0xff]
    %v802 = vld [vmem:[#allocation3 + $0x1] sm:$0xff]
    %v803 = vld [vmem:[#allocation3 + $0x9] sm:$0xff]
    %v804 = vld [vmem:[#allocation3 + $0x19] sm:$0xff]
    %v805 = vld [vmem:[#allocation3 + $0x21] sm:$0xff]
    %v806 = vld [vmem:[#allocation3 + $0x2] sm:$0xff]
    %v807 = vld [vmem:[#allocation3 + $0xa] sm:$0xff]
    %v808 = vld [vmem:[#allocation3 + $0x1a] sm:$0xff]
    %v809 = vld [vmem:[#allocation3 + $0x22] sm:$0xff]
    %v810 = vld [vmem:[%s7] sm:$0xff]
    %v811 = vld [vmem:[%s7 + $0x8] sm:$0xff]
    %v812 = vld [vmem:[%s7 + $0x10] sm:$0xff]
    %v813 = vld [vmem:[%s7 + $0x18] sm:$0xff]
    %v814 = vld [vmem:[%s7 + $0x20] sm:$0xff]
    %v815 = vld [vmem:[%s7 + $0x28] sm:$0xff]
    %v816 = vld [vmem:[%s7 + $0x30] sm:$0xff]
    %v817 = vld [vmem:[%s7 + $0x38] sm:$0xff]
    %v818 = vld [vmem:[%s7 + $0x40] sm:$0xff]
    %v819 = vld [vmem:[%s7 + $0x48] sm:$0xff]
    %v820 = vld [vmem:[%s7 + $0x50] sm:$0xff]
    %v821 = vld [vmem:[%s7 + $0x58] sm:$0xff]
    %v822 = vld [vmem:[%s7 + $0x60] sm:$0xff]
    %v823 = vld [vmem:[%s7 + $0x68] sm:$0xff]
    %v824 = vld [vmem:[%s7 + $0x70] sm:$0xff]
    %v825 = vld [vmem:[%s7 + $0x78] sm:$0xff]
    %v826 = vld [vmem:[%s7 + $0x80] sm:$0xff]
    %v827 = vld [vmem:[%s7 + $0x88] sm:$0xff]
    %v828 = vld [vmem:[%s7 + $0x90] sm:$0xff]
    %v829 = vld [vmem:[%s7 + $0x98] sm:$0xff]
    %v830 = vld [vmem:[%s7 + $0xa0] sm:$0xff]
    %v831 = vld [vmem:[%s7 + $0xa8] sm:$0xff]
    %v832 = vld [vmem:[%s7 + $0xb0] sm:$0xff]
    %v833 = vld [vmem:[%s7 + $0xb8] sm:$0xff]
    %v834 = vld [vmem:[%s7 + $0xc0] sm:$0xff]
    %v835 = vld [vmem:[%s7 + $0xc8] sm:$0xff]
    %v836 = vld [vmem:[%s7 + $0xd0] sm:$0xff]
    %v837 = vld [vmem:[%s7 + $0xd8] sm:$0xff]
    %v838 = vld [vmem:[%s7 + $0xe0] sm:$0xff]
    %v839 = vld [vmem:[%s7 + $0xe8] sm:$0xff]
    %v840 = vld [vmem:[%s7 + $0xf0] sm:$0xff]
    %v841 = vld [vmem:[%s7 + $0xf8] sm:$0xff]
    %v842 = vld [vmem:[%s7 + $0x100] sm:$0xff]
    %v843 = vld [vmem:[%s7 + $0x108] sm:$0xff]
    %v844 = vld [vmem:[%s7 + $0x110] sm:$0xff]
    %v845 = vld [vmem:[%s7 + $0x118] sm:$0xff]
    %v846 = vld [vmem:[%s7 + $0x120] sm:$0xff]
    %v847 = vld [vmem:[%s7 + $0x128] sm:$0xff]
    %v848 = vld [vmem:[%s7 + $0x130] sm:$0xff]
    %v849 = vld [vmem:[%s7 + $0x138] sm:$0xff]
    %v850 = vld [vmem:[%s7 + $0x140] sm:$0xff]
    %v851 = vld [vmem:[%s7 + $0x148] sm:$0xff]
    %v852 = vld [vmem:[%s7 + $0x150] sm:$0xff]
    %v853 = vld [vmem:[%s7 + $0x158] sm:$0xff]
    %v854 = vld [vmem:[%s7 + $0x160] sm:$0xff]
    %v855 = vld [vmem:[%s7 + $0x168] sm:$0xff]
    %v856 = vld [vmem:[%s7 + $0x170] sm:$0xff]
    %v857 = vld [vmem:[%s7 + $0x178] sm:$0xff]
    %v858 = vld [vmem:[%s8] sm:$0x1]
    %v860 = vlaneseq
    %v861 = vshrl.u32 %v860, 7
    %v862 = vsub.s32 0, %v861
    %v863 = vrot.slane %v858, %v862
    %865 = vmatprep.subr.mxu0 0.0
    %866 = vmatpush1.msra.mxu0 %v810
    %867 = vmatprep.subr.mxu0 0.0
    %868 = vmatpush1.msra.mxu0 %v811
    %869 = vmatprep.subr.mxu0 0.0
    %870 = vmatpush1.msra.mxu0 %v812
    %871 = vmatprep.subr.mxu0 0.0
    %872 = vmatpush1.msra.mxu0 %v813
    %873 = vmatprep.subr.mxu0 0.0
    %874 = vmatpush1.msra.mxu0 %v814
    %875 = vmatprep.subr.mxu0 0.0
    %876 = vmatpush1.msra.mxu0 %v815
    %877 = vmatprep.subr.mxu0 0.0
    %878 = vmatpush1.msra.mxu0 %v816
    %879 = vmatprep.subr.mxu0 0.0
    %880 = vmatpush1.msra.mxu0 %v817
    %881 = vmatprep.subr.mxu0 0.0
    %882 = vmatpush1.msra.mxu0 %v818
    %883 = vmatprep.subr.mxu0 0.0
    %884 = vmatpush1.msra.mxu0 %v819
    %885 = vmatprep.subr.mxu0 0.0
    %886 = vmatpush1.msra.mxu0 %v820
    %887 = vmatprep.subr.mxu0 0.0
    %888 = vmatpush1.msra.mxu0 %v821
    %889 = vmatprep.subr.mxu0 0.0
    %890 = vmatpush1.msra.mxu0 %v822
    %891 = vmatprep.subr.mxu0 0.0
    %892 = vmatpush1.msra.mxu0 %v823
    %893 = vmatprep.subr.mxu0 0.0
    %894 = vmatpush1.msra.mxu0 %v824
    %895 = vmatprep.subr.mxu0 0.0
    %896 = vmatpush1.msra.mxu0 %v825
    %897 = vmatprep.subr.mxu0 0.0
    %898 = vmatpush1.msra.mxu0 %v826
    %899 = vmatprep.subr.mxu0 0.0
    %900 = vmatpush1.msra.mxu0 %v827
    %901 = vmatprep.subr.mxu0 0.0
    %902 = vmatpush1.msra.mxu0 %v828
    %903 = vmatprep.subr.mxu0 0.0
    %904 = vmatpush1.msra.mxu0 %v829
    %905 = vmatprep.subr.mxu0 0.0
    %906 = vmatpush1.msra.mxu0 %v830
    %907 = vmatprep.subr.mxu0 0.0
    %908 = vmatpush1.msra.mxu0 %v831
    %909 = vmatprep.subr.mxu0 0.0
    %910 = vmatpush1.msra.mxu0 %v832
    %911 = vmatprep.subr.mxu0 0.0
    %912 = vmatpush1.msra.mxu0 %v833
    %913 = vmatprep.subr.mxu0 0.0
    %914 = vmatpush1.msra.mxu0 %v834
    %915 = vmatprep.subr.mxu0 0.0
    %916 = vmatpush1.msra.mxu0 %v835
    %917 = vmatprep.subr.mxu0 0.0
    %918 = vmatpush1.msra.mxu0 %v836
    %919 = vmatprep.subr.mxu0 0.0
    %920 = vmatpush1.msra.mxu0 %v837
    %921 = vmatprep.subr.mxu0 0.0
    %922 = vmatpush1.msra.mxu0 %v838
    %923 = vmatprep.subr.mxu0 0.0
    %924 = vmatpush1.msra.mxu0 %v839
    %925 = vmatprep.subr.mxu0 0.0
    %926 = vmatpush1.msra.mxu0 %v840
    %927 = vmatprep.subr.mxu0 0.0
    %928 = vmatpush1.msra.mxu0 %v841
    %929 = vmatprep.mubr.f32.mxu0 %v802
    %930 = vmatmul.mubr.f32.gmra.mrb[0].mxu0 %v798
    %v931 = vpop.f32.mrb[0].mxu0
    %v932 = vadd.f32 %v863, %v931
    %v933 = vpop.f32.mrb[0].mxu0
    %934 = vmatprep.mubr.f32.mxu0 %v803
    %935 = vmatmul.mubr.f32.gmra.mrb[0].mxu0 %v799
    %v936 = vpop.f32.mrb[0].mxu0
    %v937 = vadd.f32 %v863, %v936
    %v938 = vpop.f32.mrb[0].mxu0
    %939 = vmatprep.mubr.f32.mxu0 %v804
    %940 = vmatmul.mubr.f32.gmra.mrb[0].mxu0 %v800
    %v941 = vpop.f32.mrb[0].mxu0
    %v942 = vadd.f32 %v863, %v941
    %v943 = vpop.f32.mrb[0].mxu0
    %944 = vmatprep.mubr.f32.mxu0 %v805
    %945 = vmatmul.mubr.f32.gmra.mrb[0].mxu0 %v801
    %v946 = vpop.f32.mrb[0].mxu0
    %v947 = vadd.f32 %v863, %v946
    %v948 = vpop.f32.mrb[0].mxu0
    %949 = vdwg.mxu0
    %950 = vmatprep.subr.mxu0 0.0
    %951 = vmatpush1.msra.mxu0 %v842
    %952 = vmatprep.subr.mxu0 0.0
    %953 = vmatpush1.msra.mxu0 %v843
    %954 = vmatprep.subr.mxu0 0.0
    %955 = vmatpush1.msra.mxu0 %v844
    %956 = vmatprep.subr.mxu0 0.0
    %957 = vmatpush1.msra.mxu0 %v845
    %958 = vmatprep.subr.mxu0 0.0
    %959 = vmatpush1.msra.mxu0 %v846
    %960 = vmatprep.subr.mxu0 0.0
    %961 = vmatpush1.msra.mxu0 %v847
    %962 = vmatprep.subr.mxu0 0.0
    %963 = vmatpush1.msra.mxu0 %v848
    %964 = vmatprep.subr.mxu0 0.0
    %965 = vmatpush1.msra.mxu0 %v849
    %966 = vmatprep.subr.mxu0 0.0
    %967 = vmatpush1.msra.mxu0 %v850
    %968 = vmatprep.subr.mxu0 0.0
    %969 = vmatpush1.msra.mxu0 %v851
    %970 = vmatprep.subr.mxu0 0.0
    %971 = vmatpush1.msra.mxu0 %v852
    %972 = vmatprep.subr.mxu0 0.0
    %973 = vmatpush1.msra.mxu0 %v853
    %974 = vmatprep.subr.mxu0 0.0
    %975 = vmatpush1.msra.mxu0 %v854
    %976 = vmatprep.subr.mxu0 0.0
    %977 = vmatpush1.msra.mxu0 %v855
    %978 = vmatprep.subr.mxu0 0.0
    %979 = vmatpush1.msra.mxu0 %v856
    %980 = vmatprep.subr.mxu0 0.0
    %981 = vmatpush1.msra.mxu0 %v857
    %982 = vmatprep.subr.mxu0 0.0
    %983 = vmatpush1.msra.mxu0 0.0
    %984 = vmatprep.subr.mxu0 0.0
    %985 = vmatpush1.msra.mxu0 0.0
    %986 = vmatprep.subr.mxu0 0.0
    %987 = vmatpush1.msra.mxu0 0.0
    %988 = vmatprep.subr.mxu0 0.0
    %989 = vmatpush1.msra.mxu0 0.0
    %990 = vmatprep.subr.mxu0 0.0
    %991 = vmatpush1.msra.mxu0 0.0
    %992 = vmatprep.subr.mxu0 0.0
    %993 = vmatpush1.msra.mxu0 0.0
    %994 = vmatprep.subr.mxu0 0.0
    %995 = vmatpush1.msra.mxu0 0.0
    %996 = vmatprep.subr.mxu0 0.0
    %997 = vmatpush1.msra.mxu0 0.0
    %998 = vmatprep.subr.mxu0 0.0
    %999 = vmatpush1.msra.mxu0 0.0
    %1000 = vmatprep.subr.mxu0 0.0
    %1001 = vmatpush1.msra.mxu0 0.0
    %1002 = vmatprep.subr.mxu0 0.0
    %1003 = vmatpush1.msra.mxu0 0.0
    %1004 = vmatprep.subr.mxu0 0.0
    %1005 = vmatpush1.msra.mxu0 0.0
    %1006 = vmatprep.subr.mxu0 0.0
    %1007 = vmatpush1.msra.mxu0 0.0
    %1008 = vmatprep.subr.mxu0 0.0
    %1009 = vmatpush1.msra.mxu0 0.0
    %1010 = vmatprep.subr.mxu0 0.0
    %1011 = vmatpush1.msra.mxu0 0.0
    %1012 = vmatprep.subr.mxu0 0.0
    %1013 = vmatpush1.msra.mxu0 0.0
    %1014 = vmatprep.mubr.f32.mxu0 0.0
    %1015 = vmatmul.mubr.f32.gmra.mrb[0].mxu0 %v806
    %v1016 = vpop.f32.mrb[0].mxu0
    %v1017 = vadd.f32 %v932, %v1016
    %v1018 = vpop.f32.mrb[0].mxu0
    %1019 = vmatprep.mubr.f32.mxu0 0.0
    %1020 = vmatmul.mubr.f32.gmra.mrb[0].mxu0 %v807
    %v1021 = vpop.f32.mrb[0].mxu0
    %v1022 = vadd.f32 %v937, %v1021
    %v1023 = vpop.f32.mrb[0].mxu0
    %1024 = vmatprep.mubr.f32.mxu0 0.0
    %1025 = vmatmul.mubr.f32.gmra.mrb[0].mxu0 %v808
    %v1026 = vpop.f32.mrb[0].mxu0
    %v1027 = vadd.f32 %v942, %v1026
    %v1028 = vpop.f32.mrb[0].mxu0
    %1029 = vmatprep.mubr.f32.mxu0 0.0
    %1030 = vmatmul.mubr.f32.gmra.mrb[0].mxu0 %v809
    %v1031 = vpop.f32.mrb[0].mxu0
    %v1032 = vadd.f32 %v947, %v1031
    %v1033 = vpop.f32.mrb[0].mxu0
    %1034 = vdwg.mxu0
    %v1035 = vxor.u32 %v1017, 2147483648
    %v1036 = vxor.u32 %v1022, 2147483648
    %v1037 = vxor.u32 %v1027, 2147483648
    %v1038 = vxor.u32 %v1032, 2147483648
    %v1039 = vmul.f32 %v1035, 1.442695
    %v1040 = vpow.pop %v1039
    %v1041 = vmul.f32 %v1036, 1.442695
    %v1042 = vpow.pop %v1041
    %v1043 = vmul.f32 %v1037, 1.442695
    %v1044 = vpow.pop %v1043
    %v1045 = vmul.f32 %v1038, 1.442695
    %v1046 = vpow.pop %v1045
    %v1047 = vadd.f32 %v1040, 1.0
    %v1048 = vadd.f32 %v1042, 1.0
    %v1049 = vadd.f32 %v1044, 1.0
    %v1050 = vadd.f32 %v1046, 1.0
    %v1051 = vrcp.pop %v1047
    %v1052 = vmul.f32 1.0, %v1051
    %v1053 = vrcp.pop %v1048
    %v1054 = vmul.f32 1.0, %v1053
    %v1055 = vrcp.pop %v1049
    %v1056 = vmul.f32 1.0, %v1055
    %v1057 = vrcp.pop %v1050
    %v1058 = vmul.f32 1.0, %v1057
    %1061 = vrot.lane.b32.xlu0 %v1056, 64
    %v1062 = vpop.permute.xlu0 %1061
    %1063 = vrot.lane.b32.xlu0 %v1058, 64
    %v1064 = vpop.permute.xlu0 %1063
    %v1067 = vsel %vm59, %v1052, %v1062
    %v1068 = vsel %vm59, %v1054, %v1064
    %1069 = vst [vmem:[%s12] sm:$0xff] %v1067
    %1070 = vst [vmem:[%s12 + $0x8] sm:$0xff] %v1068
    // Predicated region
    $region42: #{ccn_forward.1} parent=1 // pred_check
      _
    $region43: #{ccn_forward.1} parent=1 // pred_check_branch
      %1072 = sbr.rel (0) target = $region45
    $region44: #{ccn_forward.1} parent=1 // pred_region
      _
    $region45: #{ccn_forward.1} parent=1 // pred_fallthru
      _
    // Predicated region
    $region46: #{ccn_forward.1} parent=1 // pred_check
      _
    $region47: #{ccn_forward.1} parent=1 // pred_check_branch
      %1074 = sbr.rel (0) target = $region49
    $region48: #{ccn_forward.1} parent=1 // pred_region
      _
    $region49: #{ccn_forward.1} parent=1 // pred_fallthru
      _
    // Predicated region
    $region50: #{ccn_forward.1} parent=1 // pred_check
      _
    $region51: #{ccn_forward.1} parent=1 // pred_check_branch
      %1076 = sbr.rel (0) target = $region53
    $region52: #{ccn_forward.1} parent=1 // pred_region
      _
    $region53: #{ccn_forward.1} parent=1 // pred_fallthru
      _
    // Predicated region
    $region54: #{ccn_forward.1} parent=1 // pred_check
      _
    $region55: #{ccn_forward.1} parent=1 // pred_check_branch
      %1078 = sbr.rel (0) target = $region57
    $region56: #{ccn_forward.1} parent=1 // pred_region
      _
    $region57: #{ccn_forward.1} parent=1 // pred_fallthru
      _
    // Predicated region
    $region58: #{ccn_forward.1} parent=1 // pred_check
      _
    $region59: #{ccn_forward.1} parent=1 // pred_check_branch
      %1080 = sbr.rel (0) target = $region61
    $region60: #{ccn_forward.1} parent=1 // pred_region
      _
    $region61: #{ccn_forward.1} parent=1 // pred_fallthru
      _
    // Predicated region
    $region62: #{ccn_forward.1} parent=1 // pred_check
      _
    $region63: #{ccn_forward.1} parent=1 // pred_check_branch
      %1082 = sbr.rel (0) target = $region65
    $region64: #{ccn_forward.1} parent=1 // pred_region
      _
    $region65: #{ccn_forward.1} parent=1 // pred_fallthru
      _
    // Predicated region
    $region66: #{ccn_forward.1} parent=1 // pred_check
      _
    $region67: #{ccn_forward.1} parent=1 // pred_check_branch
      %1084 = sbr.rel (0) target = $region69
    $region68: #{ccn_forward.1} parent=1 // pred_region
      _
    $region69: #{ccn_forward.1} parent=1 // pred_fallthru
      _
    // Predicated region
    $region70: #{ccn_forward.1} parent=1 // pred_check
      _
    $region71: #{ccn_forward.1} parent=1 // pred_check_branch
      %1086 = sbr.rel (0) target = $region73
    $region72: #{ccn_forward.1} parent=1 // pred_region
      _
    $region73: #{ccn_forward.1} parent=1 // pred_fallthru
      _
    %1087 = vsyncpa [#allocation5], 1

</llo_original>
